<compile_context>
chip_gen: v5e
topology: v5e:2x2
jax: 0.10.0
libtpu: 0.0.40
codegen_flags: <defaults>
</compile_context>

<pallas_src>
import functools

import jax
import jax.numpy as jnp
from jax.experimental import pallas as pl
from jax.experimental.pallas import tpu as pltpu

_LANE = 128


def _lstm_fc_kernel(x_ref, w_ih_ref, w_hh_ref, b_ref, w_fc_ref, b_fc_ref,
                    out_ref, gx_scr, *, seq_len, batch):
    """x_ref: [T*B, E]; weights padded so every gate block is Hp (=128k) lanes wide."""
    hp = w_hh_ref.shape[0]                       # padded hidden size (multiple of 128)

    # --- Hoisted input projection: one big MXU matmul for all T steps, bias added once.
    gx_scr[...] = (jnp.dot(x_ref[...], w_ih_ref[...],
                           preferred_element_type=jnp.float32)
                   + b_ref[...])                 # [T*B, 4*Hp]

    w_hh = w_hh_ref[...]                         # keep recurrent weights in registers/VMEM

    def step(t, carry):
        h, c = carry
        start = pl.multiple_of(t * batch, batch)
        gates = (gx_scr[pl.ds(start, batch), :]
                 + jnp.dot(h, w_hh, preferred_element_type=jnp.float32))  # (B, 4*Hp)

        # Lane-aligned gate slices (each exactly Hp = k*128 lanes wide).
        i_g = jax.nn.sigmoid(gates[:, 0 * hp:1 * hp])
        f_g = jax.nn.sigmoid(gates[:, 1 * hp:2 * hp])
        g_g = jnp.tanh(gates[:, 2 * hp:3 * hp])
        o_g = jax.nn.sigmoid(gates[:, 3 * hp:4 * hp])

        c_new = f_g * c + i_g * g_g
        h_new = o_g * jnp.tanh(c_new)
        return (h_new, c_new)

    h0 = jnp.zeros((batch, hp), jnp.float32)
    c0 = jnp.zeros((batch, hp), jnp.float32)
    h_last, _ = jax.lax.fori_loop(0, seq_len, step, (h0, c0), unroll=True)

    # Final Linear on the last hidden state; lane-dense (Op is a multiple of 128).
    out_ref[...] = (jnp.dot(h_last, w_fc_ref[...],
                            preferred_element_type=jnp.float32)
                    + b_fc_ref[...]).astype(out_ref.dtype)


def rnn_forward(tokens, params):
    """tokens: [T, B] int32. Returns fc(h_T): [B, output_dim] float32."""
    T, B = tokens.shape
    E = params["embedding"].shape[1]
    H = params["w_hh"].shape[0]
    O = params["w_fc"].shape[1]

    Hp = pl.cdiv(H, _LANE) * _LANE               # lane-aligned hidden
    Op = pl.cdiv(O, _LANE) * _LANE               # lane-dense fc output

    # Embedding gather (+ eval-mode dropout == identity) as plain JAX glue.
    emb = params["embedding"][tokens]            # [T, B, E]
    x_flat = emb.reshape(T * B, E)               # reshape outside the kernel (free)

    # Pad per-gate column blocks to Hp lanes; pad hidden rows of W_hh / W_fc;
    # pad fc bias/output to Op lanes. Zero padding keeps padded lanes exactly 0.
    def pad_gate_cols(w):                        # [K, 4H] -> [K, 4*Hp]
        k = w.shape[0]
        w4 = w.reshape(k, 4, H)
        return (jnp.zeros((k, 4, Hp), w.dtype).at[:, :, :H].set(w4)
                .reshape(k, 4 * Hp))

    w_ih_p = pad_gate_cols(params["w_ih"])                               # [E, 4Hp]
    w_hh_p = (jnp.zeros((Hp, 4 * Hp), jnp.float32)
              .at[:H, :].set(pad_gate_cols(params["w_hh"])))             # [Hp, 4Hp]
    b4 = (params["b_ih"] + params["b_hh"]).reshape(4, H)
    b_p = (jnp.zeros((4, Hp), jnp.float32).at[:, :H].set(b4)
           .reshape(1, 4 * Hp))                                          # [1, 4Hp]
    w_fc_p = (jnp.zeros((Hp, Op), jnp.float32)
              .at[:H, :O].set(params["w_fc"]))                           # [Hp, Op]
    b_fc_p = jnp.zeros((1, Op), jnp.float32).at[0, :O].set(params["b_fc"])

    kernel = functools.partial(_lstm_fc_kernel, seq_len=T, batch=B)
    vmem_spec = pl.BlockSpec(memory_space=pltpu.MemorySpace.VMEM)

    out_p = pl.pallas_call(
        kernel,
        out_shape=jax.ShapeDtypeStruct((B, Op), jnp.float32),
        in_specs=[vmem_spec] * 6,
        out_specs=vmem_spec,
        scratch_shapes=[pltpu.VMEM((T * B, 4 * Hp), jnp.float32)],        # hoisted gates_x
    )(x_flat, w_ih_p, w_hh_p, b_p, w_fc_p, b_fc_p)

    return out_p[:, :O]


def rnn_forward_ref(tokens, params):
    """Pure-JAX reference (same math) for a correctness check."""
    emb = params["embedding"][tokens]
    H = params["w_hh"].shape[0]
    b = params["b_ih"] + params["b_hh"]

    def step(carry, x_t):
        h, c = carry
        gates = x_t @ params["w_ih"] + h @ params["w_hh"] + b
        i = jax.nn.sigmoid(gates[:, 0 * H:1 * H])
        f = jax.nn.sigmoid(gates[:, 1 * H:2 * H])
        g = jnp.tanh(gates[:, 2 * H:3 * H])
        o = jax.nn.sigmoid(gates[:, 3 * H:4 * H])
        c = f * c + i * g
        h = o * jnp.tanh(c)
        return (h, c), None

    B = tokens.shape[1]
    h0 = jnp.zeros((B, H), jnp.float32)
    (h, _), _ = jax.lax.scan(step, (h0, h0), emb)
    return h @ params["w_fc"] + params["b_fc"]


def init_params(key, vocab_size, output_dim, embedding_dim, hidden_dim):
    ks = jax.random.split(key, 7)
    s = 0.1
    return {
        "embedding": jax.random.normal(ks[0], (vocab_size, embedding_dim), jnp.float32),
        # stored transposed: [E, 4H], [H, 4H]; PyTorch gate order (i, f, g, o)
        "w_ih": s * jax.random.normal(ks[1], (embedding_dim, 4 * hidden_dim), jnp.float32),
        "w_hh": s * jax.random.normal(ks[2], (hidden_dim, 4 * hidden_dim), jnp.float32),
        "b_ih": s * jax.random.normal(ks[3], (4 * hidden_dim,), jnp.float32),
        "b_hh": s * jax.random.normal(ks[4], (4 * hidden_dim,), jnp.float32),
        "w_fc": s * jax.random.normal(ks[5], (hidden_dim, output_dim), jnp.float32),
        "b_fc": s * jax.random.normal(ks[6], (output_dim,), jnp.float32),
    }


if __name__ == "__main__":
    # Small shapes consistent with the module's forward (x: [seq_len, batch]).
    T, B = 8, 8
    vocab_size, output_dim = 50, 7
    embedding_dim, hidden_dim = 32, 32

    key = jax.random.PRNGKey(0)
    kp, kx = jax.random.split(key)
    params = init_params(kp, vocab_size, output_dim, embedding_dim, hidden_dim)
    tokens = jax.random.randint(kx, (T, B), 0, vocab_size, dtype=jnp.int32)

    out = rnn_forward(tokens, params)
    out = jax.block_until_ready(out)

    ref = jax.block_until_ready(rnn_forward_ref(tokens, params))
    assert out.shape == (B, output_dim)
    assert jnp.allclose(out, ref, atol=1e-4, rtol=1e-4)

    print("KERNEL_OK")
</pallas_src>

<mosaic_0001>
module attributes {stable_mosaic.version = 11 : i64} {
  func.func @_lstm_fc_kernel(%arg0: memref<64x32xf32, #tpu.memory_space<vmem>>, %arg1: memref<32x512xf32, #tpu.memory_space<vmem>>, %arg2: memref<128x512xf32, #tpu.memory_space<vmem>>, %arg3: memref<1x512xf32, #tpu.memory_space<vmem>>, %arg4: memref<128x128xf32, #tpu.memory_space<vmem>>, %arg5: memref<1x128xf32, #tpu.memory_space<vmem>>, %arg6: memref<8x128xf32, #tpu.memory_space<vmem>>, %arg7: memref<64x512xf32, #tpu.memory_space<vmem>>) attributes {dimension_semantics = [], scalar_prefetch = 0 : i64, scratch_operands = 1 : i64, tpu.core_type = #tpu.core_type<tc>} {
    %c0 = arith.constant 0 : index
    %c0_0 = arith.constant 0 : index
    %0 = vector.load %arg0[%c0, %c0_0] : memref<64x32xf32, #tpu.memory_space<vmem>>, vector<64x32xf32>
    %c0_1 = arith.constant 0 : index
    %c0_2 = arith.constant 0 : index
    %1 = vector.load %arg1[%c0_1, %c0_2] : memref<32x512xf32, #tpu.memory_space<vmem>>, vector<32x512xf32>
    %cst = arith.constant dense<0.000000e+00> : vector<64x512xf32>
    %2 = tpu.matmul %0, %1, %cst {dimension_numbers = #tpu.dot_dimension_numbers<[1], [0], [0], [1], [0, 0, 1, 1], [], []>} : vector<64x32xf32>, vector<32x512xf32>, vector<64x512xf32> -> vector<64x512xf32>
    %c0_3 = arith.constant 0 : index
    %c0_4 = arith.constant 0 : index
    %3 = vector.load %arg3[%c0_3, %c0_4] : memref<1x512xf32, #tpu.memory_space<vmem>>, vector<1x512xf32>
    %4 = vector.broadcast %3 : vector<1x512xf32> to vector<64x512xf32>
    %5 = arith.addf %2, %4 : vector<64x512xf32>
    %c0_5 = arith.constant 0 : index
    %c0_6 = arith.constant 0 : index
    %6 = vector.load %arg7[%c0_5, %c0_6] : memref<64x512xf32, #tpu.memory_space<vmem>>, vector<64x512xf32>
    tpu.vector_store %arg7[%c0_5, %c0_6], %5 {strides = array<i32>} : memref<64x512xf32, #tpu.memory_space<vmem>>, vector<64x512xf32>,
    %c0_7 = arith.constant 0 : index
    %c0_8 = arith.constant 0 : index
    %7 = vector.load %arg2[%c0_7, %c0_8] : memref<128x512xf32, #tpu.memory_space<vmem>>, vector<128x512xf32>
    %cst_9 = arith.constant 0.000000e+00 : f32
    %8 = vector.broadcast %cst_9 : f32 to vector<8x128xf32>
    %cst_10 = arith.constant 0.000000e+00 : f32
    %9 = vector.broadcast %cst_10 : f32 to vector<8x128xf32>
    %c0_i32 = arith.constant 0 : i32
    %c8_i32 = arith.constant 8 : i32
    %10 = arith.muli %c0_i32, %c8_i32 : i32
    %11 = tpu.assume_multiple %10, 8 : i32
    %12 = arith.index_cast %11 : i32 to index
    %c0_11 = arith.constant 0 : index
    %13 = vector.load %arg7[%12, %c0_11] : memref<64x512xf32, #tpu.memory_space<vmem>>, vector<8x512xf32>
    %cst_12 = arith.constant dense<0.000000e+00> : vector<8x512xf32>
    %14 = tpu.matmul %8, %7, %cst_12 {dimension_numbers = #tpu.dot_dimension_numbers<[1], [0], [0], [1], [0, 0, 1, 1], [], []>} : vector<8x128xf32>, vector<128x512xf32>, vector<8x512xf32> -> vector<8x512xf32>
    %15 = arith.addf %13, %14 : vector<8x512xf32>
    %16 = vector.extract_strided_slice %15 {offsets = [0, 0], sizes = [8, 128], strides = [1, 1]} : vector<8x512xf32> to vector<8x128xf32>
    %17 = arith.negf %16 : vector<8x128xf32>
    %18 = math.exp %17 : vector<8x128xf32>
    %cst_13 = arith.constant 1.000000e+00 : f32
    %19 = vector.broadcast %cst_13 : f32 to vector<8x128xf32>
    %20 = arith.addf %19, %18 : vector<8x128xf32>
    %21 = arith.divf %19, %20 : vector<8x128xf32>
    %22 = vector.extract_strided_slice %15 {offsets = [0, 128], sizes = [8, 128], strides = [1, 1]} : vector<8x512xf32> to vector<8x128xf32>
    %23 = arith.negf %22 : vector<8x128xf32>
    %24 = math.exp %23 : vector<8x128xf32>
    %cst_14 = arith.constant 1.000000e+00 : f32
    %25 = vector.broadcast %cst_14 : f32 to vector<8x128xf32>
    %26 = arith.addf %25, %24 : vector<8x128xf32>
    %27 = arith.divf %25, %26 : vector<8x128xf32>
    %28 = vector.extract_strided_slice %15 {offsets = [0, 256], sizes = [8, 128], strides = [1, 1]} : vector<8x512xf32> to vector<8x128xf32>
    %29 = math.tanh %28 : vector<8x128xf32>
    %30 = vector.extract_strided_slice %15 {offsets = [0, 384], sizes = [8, 128], strides = [1, 1]} : vector<8x512xf32> to vector<8x128xf32>
    %31 = arith.negf %30 : vector<8x128xf32>
    %32 = math.exp %31 : vector<8x128xf32>
    %cst_15 = arith.constant 1.000000e+00 : f32
    %33 = vector.broadcast %cst_15 : f32 to vector<8x128xf32>
    %34 = arith.addf %33, %32 : vector<8x128xf32>
    %35 = arith.divf %33, %34 : vector<8x128xf32>
    %36 = arith.mulf %27, %9 : vector<8x128xf32>
    %37 = arith.mulf %21, %29 : vector<8x128xf32>
    %38 = arith.addf %36, %37 : vector<8x128xf32>
    %39 = math.tanh %38 : vector<8x128xf32>
    %40 = arith.mulf %35, %39 : vector<8x128xf32>
    %c1_i32 = arith.constant 1 : i32
    %c8_i32_16 = arith.constant 8 : i32
    %41 = arith.muli %c1_i32, %c8_i32_16 : i32
    %42 = tpu.assume_multiple %41, 8 : i32
    %43 = arith.index_cast %42 : i32 to index
    %c0_17 = arith.constant 0 : index
    %44 = vector.load %arg7[%43, %c0_17] : memref<64x512xf32, #tpu.memory_space<vmem>>, vector<8x512xf32>
    %cst_18 = arith.constant dense<0.000000e+00> : vector<8x512xf32>
    %45 = tpu.matmul %40, %7, %cst_18 {dimension_numbers = #tpu.dot_dimension_numbers<[1], [0], [0], [1], [0, 0, 1, 1], [], []>} : vector<8x128xf32>, vector<128x512xf32>, vector<8x512xf32> -> vector<8x512xf32>
    %46 = arith.addf %44, %45 : vector<8x512xf32>
    %47 = vector.extract_strided_slice %46 {offsets = [0, 0], sizes = [8, 128], strides = [1, 1]} : vector<8x512xf32> to vector<8x128xf32>
    %48 = arith.negf %47 : vector<8x128xf32>
    %49 = math.exp %48 : vector<8x128xf32>
    %cst_19 = arith.constant 1.000000e+00 : f32
    %50 = vector.broadcast %cst_19 : f32 to vector<8x128xf32>
    %51 = arith.addf %50, %49 : vector<8x128xf32>
    %52 = arith.divf %50, %51 : vector<8x128xf32>
    %53 = vector.extract_strided_slice %46 {offsets = [0, 128], sizes = [8, 128], strides = [1, 1]} : vector<8x512xf32> to vector<8x128xf32>
    %54 = arith.negf %53 : vector<8x128xf32>
    %55 = math.exp %54 : vector<8x128xf32>
    %cst_20 = arith.constant 1.000000e+00 : f32
    %56 = vector.broadcast %cst_20 : f32 to vector<8x128xf32>
    %57 = arith.addf %56, %55 : vector<8x128xf32>
    %58 = arith.divf %56, %57 : vector<8x128xf32>
    %59 = vector.extract_strided_slice %46 {offsets = [0, 256], sizes = [8, 128], strides = [1, 1]} : vector<8x512xf32> to vector<8x128xf32>
    %60 = math.tanh %59 : vector<8x128xf32>
    %61 = vector.extract_strided_slice %46 {offsets = [0, 384], sizes = [8, 128], strides = [1, 1]} : vector<8x512xf32> to vector<8x128xf32>
    %62 = arith.negf %61 : vector<8x128xf32>
    %63 = math.exp %62 : vector<8x128xf32>
    %cst_21 = arith.constant 1.000000e+00 : f32
    %64 = vector.broadcast %cst_21 : f32 to vector<8x128xf32>
    %65 = arith.addf %64, %63 : vector<8x128xf32>
    %66 = arith.divf %64, %65 : vector<8x128xf32>
    %67 = arith.mulf %58, %38 : vector<8x128xf32>
    %68 = arith.mulf %52, %60 : vector<8x128xf32>
    %69 = arith.addf %67, %68 : vector<8x128xf32>
    %70 = math.tanh %69 : vector<8x128xf32>
    %71 = arith.mulf %66, %70 : vector<8x128xf32>
    %c2_i32 = arith.constant 2 : i32
    %c8_i32_22 = arith.constant 8 : i32
    %72 = arith.muli %c2_i32, %c8_i32_22 : i32
    %73 = tpu.assume_multiple %72, 8 : i32
    %74 = arith.index_cast %73 : i32 to index
    %c0_23 = arith.constant 0 : index
    %75 = vector.load %arg7[%74, %c0_23] : memref<64x512xf32, #tpu.memory_space<vmem>>, vector<8x512xf32>
    %cst_24 = arith.constant dense<0.000000e+00> : vector<8x512xf32>
    %76 = tpu.matmul %71, %7, %cst_24 {dimension_numbers = #tpu.dot_dimension_numbers<[1], [0], [0], [1], [0, 0, 1, 1], [], []>} : vector<8x128xf32>, vector<128x512xf32>, vector<8x512xf32> -> vector<8x512xf32>
    %77 = arith.addf %75, %76 : vector<8x512xf32>
    %78 = vector.extract_strided_slice %77 {offsets = [0, 0], sizes = [8, 128], strides = [1, 1]} : vector<8x512xf32> to vector<8x128xf32>
    %79 = arith.negf %78 : vector<8x128xf32>
    %80 = math.exp %79 : vector<8x128xf32>
    %cst_25 = arith.constant 1.000000e+00 : f32
    %81 = vector.broadcast %cst_25 : f32 to vector<8x128xf32>
    %82 = arith.addf %81, %80 : vector<8x128xf32>
    %83 = arith.divf %81, %82 : vector<8x128xf32>
    %84 = vector.extract_strided_slice %77 {offsets = [0, 128], sizes = [8, 128], strides = [1, 1]} : vector<8x512xf32> to vector<8x128xf32>
    %85 = arith.negf %84 : vector<8x128xf32>
    %86 = math.exp %85 : vector<8x128xf32>
    %cst_26 = arith.constant 1.000000e+00 : f32
    %87 = vector.broadcast %cst_26 : f32 to vector<8x128xf32>
    %88 = arith.addf %87, %86 : vector<8x128xf32>
    %89 = arith.divf %87, %88 : vector<8x128xf32>
    %90 = vector.extract_strided_slice %77 {offsets = [0, 256], sizes = [8, 128], strides = [1, 1]} : vector<8x512xf32> to vector<8x128xf32>
    %91 = math.tanh %90 : vector<8x128xf32>
    %92 = vector.extract_strided_slice %77 {offsets = [0, 384], sizes = [8, 128], strides = [1, 1]} : vector<8x512xf32> to vector<8x128xf32>
    %93 = arith.negf %92 : vector<8x128xf32>
    %94 = math.exp %93 : vector<8x128xf32>
    %cst_27 = arith.constant 1.000000e+00 : f32
    %95 = vector.broadcast %cst_27 : f32 to vector<8x128xf32>
    %96 = arith.addf %95, %94 : vector<8x128xf32>
    %97 = arith.divf %95, %96 : vector<8x128xf32>
    %98 = arith.mulf %89, %69 : vector<8x128xf32>
    %99 = arith.mulf %83, %91 : vector<8x128xf32>
    %100 = arith.addf %98, %99 : vector<8x128xf32>
    %101 = math.tanh %100 : vector<8x128xf32>
    %102 = arith.mulf %97, %101 : vector<8x128xf32>
    %c3_i32 = arith.constant 3 : i32
    %c8_i32_28 = arith.constant 8 : i32
    %103 = arith.muli %c3_i32, %c8_i32_28 : i32
    %104 = tpu.assume_multiple %103, 8 : i32
    %105 = arith.index_cast %104 : i32 to index
    %c0_29 = arith.constant 0 : index
    %106 = vector.load %arg7[%105, %c0_29] : memref<64x512xf32, #tpu.memory_space<vmem>>, vector<8x512xf32>
    %cst_30 = arith.constant dense<0.000000e+00> : vector<8x512xf32>
    %107 = tpu.matmul %102, %7, %cst_30 {dimension_numbers = #tpu.dot_dimension_numbers<[1], [0], [0], [1], [0, 0, 1, 1], [], []>} : vector<8x128xf32>, vector<128x512xf32>, vector<8x512xf32> -> vector<8x512xf32>
    %108 = arith.addf %106, %107 : vector<8x512xf32>
    %109 = vector.extract_strided_slice %108 {offsets = [0, 0], sizes = [8, 128], strides = [1, 1]} : vector<8x512xf32> to vector<8x128xf32>
    %110 = arith.negf %109 : vector<8x128xf32>
    %111 = math.exp %110 : vector<8x128xf32>
    %cst_31 = arith.constant 1.000000e+00 : f32
    %112 = vector.broadcast %cst_31 : f32 to vector<8x128xf32>
    %113 = arith.addf %112, %111 : vector<8x128xf32>
    %114 = arith.divf %112, %113 : vector<8x128xf32>
    %115 = vector.extract_strided_slice %108 {offsets = [0, 128], sizes = [8, 128], strides = [1, 1]} : vector<8x512xf32> to vector<8x128xf32>
    %116 = arith.negf %115 : vector<8x128xf32>
    %117 = math.exp %116 : vector<8x128xf32>
    %cst_32 = arith.constant 1.000000e+00 : f32
    %118 = vector.broadcast %cst_32 : f32 to vector<8x128xf32>
    %119 = arith.addf %118, %117 : vector<8x128xf32>
    %120 = arith.divf %118, %119 : vector<8x128xf32>
    %121 = vector.extract_strided_slice %108 {offsets = [0, 256], sizes = [8, 128], strides = [1, 1]} : vector<8x512xf32> to vector<8x128xf32>
    %122 = math.tanh %121 : vector<8x128xf32>
    %123 = vector.extract_strided_slice %108 {offsets = [0, 384], sizes = [8, 128], strides = [1, 1]} : vector<8x512xf32> to vector<8x128xf32>
    %124 = arith.negf %123 : vector<8x128xf32>
    %125 = math.exp %124 : vector<8x128xf32>
    %cst_33 = arith.constant 1.000000e+00 : f32
    %126 = vector.broadcast %cst_33 : f32 to vector<8x128xf32>
    %127 = arith.addf %126, %125 : vector<8x128xf32>
    %128 = arith.divf %126, %127 : vector<8x128xf32>
    %129 = arith.mulf %120, %100 : vector<8x128xf32>
    %130 = arith.mulf %114, %122 : vector<8x128xf32>
    %131 = arith.addf %129, %130 : vector<8x128xf32>
    %132 = math.tanh %131 : vector<8x128xf32>
    %133 = arith.mulf %128, %132 : vector<8x128xf32>
    %c4_i32 = arith.constant 4 : i32
    %c8_i32_34 = arith.constant 8 : i32
    %134 = arith.muli %c4_i32, %c8_i32_34 : i32
    %135 = tpu.assume_multiple %134, 8 : i32
    %136 = arith.index_cast %135 : i32 to index
    %c0_35 = arith.constant 0 : index
    %137 = vector.load %arg7[%136, %c0_35] : memref<64x512xf32, #tpu.memory_space<vmem>>, vector<8x512xf32>
    %cst_36 = arith.constant dense<0.000000e+00> : vector<8x512xf32>
    %138 = tpu.matmul %133, %7, %cst_36 {dimension_numbers = #tpu.dot_dimension_numbers<[1], [0], [0], [1], [0, 0, 1, 1], [], []>} : vector<8x128xf32>, vector<128x512xf32>, vector<8x512xf32> -> vector<8x512xf32>
    %139 = arith.addf %137, %138 : vector<8x512xf32>
    %140 = vector.extract_strided_slice %139 {offsets = [0, 0], sizes = [8, 128], strides = [1, 1]} : vector<8x512xf32> to vector<8x128xf32>
    %141 = arith.negf %140 : vector<8x128xf32>
    %142 = math.exp %141 : vector<8x128xf32>
    %cst_37 = arith.constant 1.000000e+00 : f32
    %143 = vector.broadcast %cst_37 : f32 to vector<8x128xf32>
    %144 = arith.addf %143, %142 : vector<8x128xf32>
    %145 = arith.divf %143, %144 : vector<8x128xf32>
    %146 = vector.extract_strided_slice %139 {offsets = [0, 128], sizes = [8, 128], strides = [1, 1]} : vector<8x512xf32> to vector<8x128xf32>
    %147 = arith.negf %146 : vector<8x128xf32>
    %148 = math.exp %147 : vector<8x128xf32>
    %cst_38 = arith.constant 1.000000e+00 : f32
    %149 = vector.broadcast %cst_38 : f32 to vector<8x128xf32>
    %150 = arith.addf %149, %148 : vector<8x128xf32>
    %151 = arith.divf %149, %150 : vector<8x128xf32>
    %152 = vector.extract_strided_slice %139 {offsets = [0, 256], sizes = [8, 128], strides = [1, 1]} : vector<8x512xf32> to vector<8x128xf32>
    %153 = math.tanh %152 : vector<8x128xf32>
    %154 = vector.extract_strided_slice %139 {offsets = [0, 384], sizes = [8, 128], strides = [1, 1]} : vector<8x512xf32> to vector<8x128xf32>
    %155 = arith.negf %154 : vector<8x128xf32>
    %156 = math.exp %155 : vector<8x128xf32>
    %cst_39 = arith.constant 1.000000e+00 : f32
    %157 = vector.broadcast %cst_39 : f32 to vector<8x128xf32>
    %158 = arith.addf %157, %156 : vector<8x128xf32>
    %159 = arith.divf %157, %158 : vector<8x128xf32>
    %160 = arith.mulf %151, %131 : vector<8x128xf32>
    %161 = arith.mulf %145, %153 : vector<8x128xf32>
    %162 = arith.addf %160, %161 : vector<8x128xf32>
    %163 = math.tanh %162 : vector<8x128xf32>
    %164 = arith.mulf %159, %163 : vector<8x128xf32>
    %c5_i32 = arith.constant 5 : i32
    %c8_i32_40 = arith.constant 8 : i32
    %165 = arith.muli %c5_i32, %c8_i32_40 : i32
    %166 = tpu.assume_multiple %165, 8 : i32
    %167 = arith.index_cast %166 : i32 to index
    %c0_41 = arith.constant 0 : index
    %168 = vector.load %arg7[%167, %c0_41] : memref<64x512xf32, #tpu.memory_space<vmem>>, vector<8x512xf32>
    %cst_42 = arith.constant dense<0.000000e+00> : vector<8x512xf32>
    %169 = tpu.matmul %164, %7, %cst_42 {dimension_numbers = #tpu.dot_dimension_numbers<[1], [0], [0], [1], [0, 0, 1, 1], [], []>} : vector<8x128xf32>, vector<128x512xf32>, vector<8x512xf32> -> vector<8x512xf32>
    %170 = arith.addf %168, %169 : vector<8x512xf32>
    %171 = vector.extract_strided_slice %170 {offsets = [0, 0], sizes = [8, 128], strides = [1, 1]} : vector<8x512xf32> to vector<8x128xf32>
    %172 = arith.negf %171 : vector<8x128xf32>
    %173 = math.exp %172 : vector<8x128xf32>
    %cst_43 = arith.constant 1.000000e+00 : f32
    %174 = vector.broadcast %cst_43 : f32 to vector<8x128xf32>
    %175 = arith.addf %174, %173 : vector<8x128xf32>
    %176 = arith.divf %174, %175 : vector<8x128xf32>
    %177 = vector.extract_strided_slice %170 {offsets = [0, 128], sizes = [8, 128], strides = [1, 1]} : vector<8x512xf32> to vector<8x128xf32>
    %178 = arith.negf %177 : vector<8x128xf32>
    %179 = math.exp %178 : vector<8x128xf32>
    %cst_44 = arith.constant 1.000000e+00 : f32
    %180 = vector.broadcast %cst_44 : f32 to vector<8x128xf32>
    %181 = arith.addf %180, %179 : vector<8x128xf32>
    %182 = arith.divf %180, %181 : vector<8x128xf32>
    %183 = vector.extract_strided_slice %170 {offsets = [0, 256], sizes = [8, 128], strides = [1, 1]} : vector<8x512xf32> to vector<8x128xf32>
    %184 = math.tanh %183 : vector<8x128xf32>
    %185 = vector.extract_strided_slice %170 {offsets = [0, 384], sizes = [8, 128], strides = [1, 1]} : vector<8x512xf32> to vector<8x128xf32>
    %186 = arith.negf %185 : vector<8x128xf32>
    %187 = math.exp %186 : vector<8x128xf32>
    %cst_45 = arith.constant 1.000000e+00 : f32
    %188 = vector.broadcast %cst_45 : f32 to vector<8x128xf32>
    %189 = arith.addf %188, %187 : vector<8x128xf32>
    %190 = arith.divf %188, %189 : vector<8x128xf32>
    %191 = arith.mulf %182, %162 : vector<8x128xf32>
    %192 = arith.mulf %176, %184 : vector<8x128xf32>
    %193 = arith.addf %191, %192 : vector<8x128xf32>
    %194 = math.tanh %193 : vector<8x128xf32>
    %195 = arith.mulf %190, %194 : vector<8x128xf32>
    %c6_i32 = arith.constant 6 : i32
    %c8_i32_46 = arith.constant 8 : i32
    %196 = arith.muli %c6_i32, %c8_i32_46 : i32
    %197 = tpu.assume_multiple %196, 8 : i32
    %198 = arith.index_cast %197 : i32 to index
    %c0_47 = arith.constant 0 : index
    %199 = vector.load %arg7[%198, %c0_47] : memref<64x512xf32, #tpu.memory_space<vmem>>, vector<8x512xf32>
    %cst_48 = arith.constant dense<0.000000e+00> : vector<8x512xf32>
    %200 = tpu.matmul %195, %7, %cst_48 {dimension_numbers = #tpu.dot_dimension_numbers<[1], [0], [0], [1], [0, 0, 1, 1], [], []>} : vector<8x128xf32>, vector<128x512xf32>, vector<8x512xf32> -> vector<8x512xf32>
    %201 = arith.addf %199, %200 : vector<8x512xf32>
    %202 = vector.extract_strided_slice %201 {offsets = [0, 0], sizes = [8, 128], strides = [1, 1]} : vector<8x512xf32> to vector<8x128xf32>
    %203 = arith.negf %202 : vector<8x128xf32>
    %204 = math.exp %203 : vector<8x128xf32>
    %cst_49 = arith.constant 1.000000e+00 : f32
    %205 = vector.broadcast %cst_49 : f32 to vector<8x128xf32>
    %206 = arith.addf %205, %204 : vector<8x128xf32>
    %207 = arith.divf %205, %206 : vector<8x128xf32>
    %208 = vector.extract_strided_slice %201 {offsets = [0, 128], sizes = [8, 128], strides = [1, 1]} : vector<8x512xf32> to vector<8x128xf32>
    %209 = arith.negf %208 : vector<8x128xf32>
    %210 = math.exp %209 : vector<8x128xf32>
    %cst_50 = arith.constant 1.000000e+00 : f32
    %211 = vector.broadcast %cst_50 : f32 to vector<8x128xf32>
    %212 = arith.addf %211, %210 : vector<8x128xf32>
    %213 = arith.divf %211, %212 : vector<8x128xf32>
    %214 = vector.extract_strided_slice %201 {offsets = [0, 256], sizes = [8, 128], strides = [1, 1]} : vector<8x512xf32> to vector<8x128xf32>
    %215 = math.tanh %214 : vector<8x128xf32>
    %216 = vector.extract_strided_slice %201 {offsets = [0, 384], sizes = [8, 128], strides = [1, 1]} : vector<8x512xf32> to vector<8x128xf32>
    %217 = arith.negf %216 : vector<8x128xf32>
    %218 = math.exp %217 : vector<8x128xf32>
    %cst_51 = arith.constant 1.000000e+00 : f32
    %219 = vector.broadcast %cst_51 : f32 to vector<8x128xf32>
    %220 = arith.addf %219, %218 : vector<8x128xf32>
    %221 = arith.divf %219, %220 : vector<8x128xf32>
    %222 = arith.mulf %213, %193 : vector<8x128xf32>
    %223 = arith.mulf %207, %215 : vector<8x128xf32>
    %224 = arith.addf %222, %223 : vector<8x128xf32>
    %225 = math.tanh %224 : vector<8x128xf32>
    %226 = arith.mulf %221, %225 : vector<8x128xf32>
    %c7_i32 = arith.constant 7 : i32
    %c8_i32_52 = arith.constant 8 : i32
    %227 = arith.muli %c7_i32, %c8_i32_52 : i32
    %228 = tpu.assume_multiple %227, 8 : i32
    %229 = arith.index_cast %228 : i32 to index
    %c0_53 = arith.constant 0 : index
    %230 = vector.load %arg7[%229, %c0_53] : memref<64x512xf32, #tpu.memory_space<vmem>>, vector<8x512xf32>
    %cst_54 = arith.constant dense<0.000000e+00> : vector<8x512xf32>
    %231 = tpu.matmul %226, %7, %cst_54 {dimension_numbers = #tpu.dot_dimension_numbers<[1], [0], [0], [1], [0, 0, 1, 1], [], []>} : vector<8x128xf32>, vector<128x512xf32>, vector<8x512xf32> -> vector<8x512xf32>
    %232 = arith.addf %230, %231 : vector<8x512xf32>
    %233 = vector.extract_strided_slice %232 {offsets = [0, 0], sizes = [8, 128], strides = [1, 1]} : vector<8x512xf32> to vector<8x128xf32>
    %234 = arith.negf %233 : vector<8x128xf32>
    %235 = math.exp %234 : vector<8x128xf32>
    %cst_55 = arith.constant 1.000000e+00 : f32
    %236 = vector.broadcast %cst_55 : f32 to vector<8x128xf32>
    %237 = arith.addf %236, %235 : vector<8x128xf32>
    %238 = arith.divf %236, %237 : vector<8x128xf32>
    %239 = vector.extract_strided_slice %232 {offsets = [0, 128], sizes = [8, 128], strides = [1, 1]} : vector<8x512xf32> to vector<8x128xf32>
    %240 = arith.negf %239 : vector<8x128xf32>
    %241 = math.exp %240 : vector<8x128xf32>
    %cst_56 = arith.constant 1.000000e+00 : f32
    %242 = vector.broadcast %cst_56 : f32 to vector<8x128xf32>
    %243 = arith.addf %242, %241 : vector<8x128xf32>
    %244 = arith.divf %242, %243 : vector<8x128xf32>
    %245 = vector.extract_strided_slice %232 {offsets = [0, 256], sizes = [8, 128], strides = [1, 1]} : vector<8x512xf32> to vector<8x128xf32>
    %246 = math.tanh %245 : vector<8x128xf32>
    %247 = vector.extract_strided_slice %232 {offsets = [0, 384], sizes = [8, 128], strides = [1, 1]} : vector<8x512xf32> to vector<8x128xf32>
    %248 = arith.negf %247 : vector<8x128xf32>
    %249 = math.exp %248 : vector<8x128xf32>
    %cst_57 = arith.constant 1.000000e+00 : f32
    %250 = vector.broadcast %cst_57 : f32 to vector<8x128xf32>
    %251 = arith.addf %250, %249 : vector<8x128xf32>
    %252 = arith.divf %250, %251 : vector<8x128xf32>
    %253 = arith.mulf %244, %224 : vector<8x128xf32>
    %254 = arith.mulf %238, %246 : vector<8x128xf32>
    %255 = arith.addf %253, %254 : vector<8x128xf32>
    %256 = math.tanh %255 : vector<8x128xf32>
    %257 = arith.mulf %252, %256 : vector<8x128xf32>
    %c8_i32_58 = arith.constant 8 : i32
    %c0_59 = arith.constant 0 : index
    %c0_60 = arith.constant 0 : index
    %258 = vector.load %arg4[%c0_59, %c0_60] : memref<128x128xf32, #tpu.memory_space<vmem>>, vector<128x128xf32>
    %cst_61 = arith.constant dense<0.000000e+00> : vector<8x128xf32>
    %259 = tpu.matmul %257, %258, %cst_61 {dimension_numbers = #tpu.dot_dimension_numbers<[1], [0], [0], [1], [0, 0, 1, 1], [], []>} : vector<8x128xf32>, vector<128x128xf32>, vector<8x128xf32> -> vector<8x128xf32>
    %c0_62 = arith.constant 0 : index
    %c0_63 = arith.constant 0 : index
    %260 = vector.load %arg5[%c0_62, %c0_63] : memref<1x128xf32, #tpu.memory_space<vmem>>, vector<1x128xf32>
    %261 = vector.broadcast %260 : vector<1x128xf32> to vector<8x128xf32>
    %262 = arith.addf %259, %261 : vector<8x128xf32>
    %c0_64 = arith.constant 0 : index
    %c0_65 = arith.constant 0 : index
    %263 = vector.load %arg6[%c0_64, %c0_65] : memref<8x128xf32, #tpu.memory_space<vmem>>, vector<8x128xf32>
    tpu.vector_store %arg6[%c0_64, %c0_65], %262 {strides = array<i32>} : memref<8x128xf32, #tpu.memory_space<vmem>>, vector<8x128xf32>,
    return
  }
}

</mosaic_0001>

<llo_original>
// kernel: tpu_custom_call.1
$region0: #{tpu_custom_call.1}
  #allocation0 [shape = 'u32[]', space=smem, size = 0x4, offset = 0x4, fixed_abs, tag = 'smem constant byte address 0x4 - core index']
  #allocation1 [shape = 'u32[72,128]{1,0:T(1,128)}', space=vmem, size = 0x9000, scoped, tag = 'internal scratch']
  #allocation2 [shape = 'f32[64,512]{1,0:T(8,128)}', space=vmem, size = 0x20000, scoped, tag = 'scratch operand']
  %s0 = inlined_call_operand.vmem [shape: f32[64,32], index: 0, kind: input, shape index: {}]
  %s1 = inlined_call_operand.hbm [shape: f32[32,512], index: 1, kind: input, shape index: {}]
  %s2 = inlined_call_operand.hbm [shape: f32[128,512], index: 2, kind: input, shape index: {}]
  %s3 = inlined_call_operand.vmem [shape: f32[1,512], index: 3, kind: input, shape index: {}]
  %s4 = inlined_call_operand.hbm [shape: f32[128,128], index: 4, kind: input, shape index: {}]
  %s5 = inlined_call_operand.vmem [shape: f32[1,128], index: 5, kind: input, shape index: {}]
  %s6 = inlined_call_operand.hbm [shape: f32[8,128], index: 6, kind: output, shape index: {}]
  %s7 = sld [smem:[#allocation0]]
  $region46: #{tpu_custom_call.1} parent=0
    _
  %s9 = ssub.s32 1, %s7
  %s10 = scalar_select 0, %s9, %s7
  $region1: #{tpu_custom_call.1} parent=0
    #allocation3 [shape = 'u8[65536]{0}', space=vmem, size = 0x10000, scoped, tag = 'input window, operand 1, single buffered']
    #allocation4 [shape = 's32[1]{0}', space=sflag, size = 0x4, scoped, tag = 'scoped memory for tpu_custom_call.1']
    #allocation5 [shape = 's32[1]{0}', space=sflag, size = 0x4, scoped, tag = 'scoped memory for tpu_custom_call.1']
    #allocation6 [shape = 'u8[262144]{0}', space=vmem, size = 0x40000, scoped, tag = 'input window, operand 2, single buffered']
    #allocation7 [shape = 's32[1]{0}', space=sflag, size = 0x4, scoped, tag = 'scoped memory for tpu_custom_call.1']
    #allocation8 [shape = 'u8[65536]{0}', space=vmem, size = 0x10000, scoped, tag = 'input window, operand 4, single buffered']
    #allocation9 [shape = 'u8[4096]{0}', space=vmem, size = 0x1000, scoped, tag = 'output window, operand 0, single buffered']
    %11 = vsyncpa [#allocation4], 0
    %12 = vsyncpa [#allocation7], 0
    %13 = vsyncpa [#allocation5], 0
    // Predicated region
    $region2: #{tpu_custom_call.1} parent=1 // pred_check
      _
    $region3: #{tpu_custom_call.1} parent=1 // pred_check_branch
      %15 = sbr.rel (0) target = $region5
    $region4: #{tpu_custom_call.1} parent=1 // pred_region
      _
    $region5: #{tpu_custom_call.1} parent=1 // pred_fallthru
      _
    // Predicated region
    $region6: #{tpu_custom_call.1} parent=1 // pred_check
      _
    $region7: #{tpu_custom_call.1} parent=1 // pred_check_branch
      %17 = sbr.rel (0) target = $region9
    $region8: #{tpu_custom_call.1} parent=1 // pred_region
      %19 = vsyncadd [#allocation4], 0
      %s20 = sshll.u32 %s1, 4
      %s21 = int_to_ptr.hbm [resolvable:$true] %s20
      %s22 = sshll.u32 [#allocation3], 4
      %s23 = int_to_ptr.vmem [resolvable:$true] %s22
      %28 = dma.hbm_to_vmem [thread:$0]  %s21, 2048, %s23, [#allocation4], 512, 512, 32
    $region9: #{tpu_custom_call.1} parent=1 // pred_fallthru
      _
    // Predicated region
    $region10: #{tpu_custom_call.1} parent=1 // pred_check
      _
    $region11: #{tpu_custom_call.1} parent=1 // pred_check_branch
      %30 = sbr.rel (0) target = $region13
    $region12: #{tpu_custom_call.1} parent=1 // pred_region
      %32 = vsyncadd [#allocation7], 0
      %s33 = sshll.u32 %s2, 4
      %s34 = int_to_ptr.hbm [resolvable:$true] %s33
      %s35 = sshll.u32 [#allocation6], 4
      %s36 = int_to_ptr.vmem [resolvable:$true] %s35
      %41 = dma.hbm_to_vmem [thread:$0]  %s34, 8192, %s36, [#allocation7], 512, 512, 32
    $region13: #{tpu_custom_call.1} parent=1 // pred_fallthru
      _
    // Predicated region
    $region14: #{tpu_custom_call.1} parent=1 // pred_check
      _
    $region15: #{tpu_custom_call.1} parent=1 // pred_check_branch
      %43 = sbr.rel (0) target = $region17
    $region16: #{tpu_custom_call.1} parent=1 // pred_region
      _
    $region17: #{tpu_custom_call.1} parent=1 // pred_fallthru
      _
    // Predicated region
    $region18: #{tpu_custom_call.1} parent=1 // pred_check
      _
    $region19: #{tpu_custom_call.1} parent=1 // pred_check_branch
      %45 = sbr.rel (0) target = $region21
    $region20: #{tpu_custom_call.1} parent=1 // pred_region
      %47 = vsyncadd [#allocation7], 0
      %s48 = sshll.u32 %s4, 4
      %s49 = int_to_ptr.hbm [resolvable:$true] %s48
      %s50 = sshll.u32 [#allocation8], 4
      %s51 = int_to_ptr.vmem [resolvable:$true] %s50
      %56 = dma.hbm_to_vmem [thread:$0]  %s49, 2048, %s51, [#allocation7], 128, 128, 8
    $region21: #{tpu_custom_call.1} parent=1 // pred_fallthru
      _
    // Predicated region
    $region22: #{tpu_custom_call.1} parent=1 // pred_check
      _
    $region23: #{tpu_custom_call.1} parent=1 // pred_check_branch
      %58 = sbr.rel (0) target = $region25
    $region24: #{tpu_custom_call.1} parent=1 // pred_region
      _
    $region25: #{tpu_custom_call.1} parent=1 // pred_fallthru
      _
    // Predicated region
    $region26: #{tpu_custom_call.1} parent=1 // pred_check
      _
    $region27: #{tpu_custom_call.1} parent=1 // pred_check_branch
      %60 = sbr.rel (0) target = $region29
    $region28: #{tpu_custom_call.1} parent=1 // pred_region
      %62 = dma.done [#allocation4], 2048
    $region29: #{tpu_custom_call.1} parent=1 // pred_fallthru
      _
    // Predicated region
    $region30: #{tpu_custom_call.1} parent=1 // pred_check
      _
    $region31: #{tpu_custom_call.1} parent=1 // pred_check_branch
      %64 = sbr.rel (0) target = $region33
    $region32: #{tpu_custom_call.1} parent=1 // pred_region
      %66 = dma.done [#allocation7], 8192
    $region33: #{tpu_custom_call.1} parent=1 // pred_fallthru
      _
    // Predicated region
    $region34: #{tpu_custom_call.1} parent=1 // pred_check
      _
    $region35: #{tpu_custom_call.1} parent=1 // pred_check_branch
      %68 = sbr.rel (0) target = $region37
    $region36: #{tpu_custom_call.1} parent=1 // pred_region
      %70 = dma.done [#allocation7], 2048
    $region37: #{tpu_custom_call.1} parent=1 // pred_fallthru
      _
    %v71 = vld [vmem:[%s0] sm:$0xff]
    %v72 = vld [vmem:[%s0 + $0x8] sm:$0xff]
    %v73 = vld [vmem:[%s0 + $0x10] sm:$0xff]
    %v74 = vld [vmem:[%s0 + $0x18] sm:$0xff]
    %v75 = vld [vmem:[%s0 + $0x20] sm:$0xff]
    %v76 = vld [vmem:[%s0 + $0x28] sm:$0xff]
    %v77 = vld [vmem:[%s0 + $0x30] sm:$0xff]
    %v78 = vld [vmem:[%s0 + $0x38] sm:$0xff]
    %v79 = vld [vmem:[#allocation3] sm:$0xff]
    %v80 = vld [vmem:[#allocation3 + $0x8] sm:$0xff]
    %v81 = vld [vmem:[#allocation3 + $0x10] sm:$0xff]
    %v82 = vld [vmem:[#allocation3 + $0x18] sm:$0xff]
    %v83 = vld [vmem:[#allocation3 + $0x20] sm:$0xff]
    %v84 = vld [vmem:[#allocation3 + $0x28] sm:$0xff]
    %v85 = vld [vmem:[#allocation3 + $0x30] sm:$0xff]
    %v86 = vld [vmem:[#allocation3 + $0x38] sm:$0xff]
    %v87 = vld [vmem:[#allocation3 + $0x40] sm:$0xff]
    %v88 = vld [vmem:[#allocation3 + $0x48] sm:$0xff]
    %v89 = vld [vmem:[#allocation3 + $0x50] sm:$0xff]
    %v90 = vld [vmem:[#allocation3 + $0x58] sm:$0xff]
    %v91 = vld [vmem:[#allocation3 + $0x60] sm:$0xff]
    %v92 = vld [vmem:[#allocation3 + $0x68] sm:$0xff]
    %v93 = vld [vmem:[#allocation3 + $0x70] sm:$0xff]
    %v94 = vld [vmem:[#allocation3 + $0x78] sm:$0xff]
    %v95 = vld [vmem:[%s3] sm:$0xf]
    %v97 = vperm.slane %v95, 0
    %v98 = vperm.slane %v95, 1
    %v99 = vperm.slane %v95, 2
    %v100 = vperm.slane %v95, 3
    %vm105 = vcmask 261120
    %v107 = vsel %vm105, %v71, 0
    %v110 = vsel %vm105, %v72, 0
    %v113 = vsel %vm105, %v73, 0
    %v116 = vsel %vm105, %v74, 0
    %v119 = vsel %vm105, %v75, 0
    %v122 = vsel %vm105, %v76, 0
    %v125 = vsel %vm105, %v77, 0
    %v128 = vsel %vm105, %v78, 0
    %130 = vmatpush.msra.mxu0 0.0
    %131 = vmatpush.msra.mxu0 0.0
    %132 = vmatpush.msra.mxu0 0.0
    %133 = vmatpush.msra.mxu0 0.0
    %134 = vmatpush.msra.mxu0 0.0
    %135 = vmatpush.msra.mxu0 0.0
    %136 = vmatpush.msra.mxu0 0.0
    %137 = vmatpush.msra.mxu0 0.0
    %138 = vmatpush.msra.mxu0 0.0
    %139 = vmatpush.msra.mxu0 0.0
    %140 = vmatpush.msra.mxu0 0.0
    %141 = vmatpush.msra.mxu0 0.0
    %142 = vmatpush.msra.mxu0 %v91
    %143 = vmatpush.msra.mxu0 %v87
    %144 = vmatpush.msra.mxu0 %v83
    %145 = vmatpush.msra.mxu0 %v79
    %146 = vmatmul.f32.gmra.mxu0 %v107
    %v147 = vpop.f32.mrf.mxu0
    %v148 = vadd.f32 %v97, %v147
    %149 = vmatmul.f32.gmra.mxu0 %v110
    %v150 = vpop.f32.mrf.mxu0
    %v151 = vadd.f32 %v97, %v150
    %152 = vmatmul.f32.gmra.mxu0 %v113
    %v153 = vpop.f32.mrf.mxu0
    %v154 = vadd.f32 %v97, %v153
    %155 = vmatmul.f32.gmra.mxu0 %v116
    %v156 = vpop.f32.mrf.mxu0
    %v157 = vadd.f32 %v97, %v156
    %158 = vmatmul.f32.gmra.mxu0 %v119
    %v159 = vpop.f32.mrf.mxu0
    %v160 = vadd.f32 %v97, %v159
    %161 = vmatmul.f32.gmra.mxu0 %v122
    %v162 = vpop.f32.mrf.mxu0
    %v163 = vadd.f32 %v97, %v162
    %164 = vmatmul.f32.gmra.mxu0 %v125
    %v165 = vpop.f32.mrf.mxu0
    %v166 = vadd.f32 %v97, %v165
    %167 = vmatmul.f32.gmra.mxu0 %v128
    %v168 = vpop.f32.mrf.mxu0
    %v169 = vadd.f32 %v97, %v168
    %170 = vdwg.mxu0
    %171 = vmatpush.msra.mxu0 0.0
    %172 = vmatpush.msra.mxu0 0.0
    %173 = vmatpush.msra.mxu0 0.0
    %174 = vmatpush.msra.mxu0 0.0
    %175 = vmatpush.msra.mxu0 0.0
    %176 = vmatpush.msra.mxu0 0.0
    %177 = vmatpush.msra.mxu0 0.0
    %178 = vmatpush.msra.mxu0 0.0
    %179 = vmatpush.msra.mxu0 0.0
    %180 = vmatpush.msra.mxu0 0.0
    %181 = vmatpush.msra.mxu0 0.0
    %182 = vmatpush.msra.mxu0 0.0
    %183 = vmatpush.msra.mxu0 %v92
    %184 = vmatpush.msra.mxu0 %v88
    %185 = vmatpush.msra.mxu0 %v84
    %186 = vmatpush.msra.mxu0 %v80
    %187 = vmatmul.f32.gmra.mxu0 %v107
    %v188 = vpop.f32.mrf.mxu0
    %v189 = vadd.f32 %v98, %v188
    %190 = vmatmul.f32.gmra.mxu0 %v110
    %v191 = vpop.f32.mrf.mxu0
    %v192 = vadd.f32 %v98, %v191
    %193 = vmatmul.f32.gmra.mxu0 %v113
    %v194 = vpop.f32.mrf.mxu0
    %v195 = vadd.f32 %v98, %v194
    %196 = vmatmul.f32.gmra.mxu0 %v116
    %v197 = vpop.f32.mrf.mxu0
    %v198 = vadd.f32 %v98, %v197
    %199 = vmatmul.f32.gmra.mxu0 %v119
    %v200 = vpop.f32.mrf.mxu0
    %v201 = vadd.f32 %v98, %v200
    %202 = vmatmul.f32.gmra.mxu0 %v122
    %v203 = vpop.f32.mrf.mxu0
    %v204 = vadd.f32 %v98, %v203
    %205 = vmatmul.f32.gmra.mxu0 %v125
    %v206 = vpop.f32.mrf.mxu0
    %v207 = vadd.f32 %v98, %v206
    %208 = vmatmul.f32.gmra.mxu0 %v128
    %v209 = vpop.f32.mrf.mxu0
    %v210 = vadd.f32 %v98, %v209
    %211 = vdwg.mxu0
    %212 = vmatpush.msra.mxu0 0.0
    %213 = vmatpush.msra.mxu0 0.0
    %214 = vmatpush.msra.mxu0 0.0
    %215 = vmatpush.msra.mxu0 0.0
    %216 = vmatpush.msra.mxu0 0.0
    %217 = vmatpush.msra.mxu0 0.0
    %218 = vmatpush.msra.mxu0 0.0
    %219 = vmatpush.msra.mxu0 0.0
    %220 = vmatpush.msra.mxu0 0.0
    %221 = vmatpush.msra.mxu0 0.0
    %222 = vmatpush.msra.mxu0 0.0
    %223 = vmatpush.msra.mxu0 0.0
    %224 = vmatpush.msra.mxu0 %v93
    %225 = vmatpush.msra.mxu0 %v89
    %226 = vmatpush.msra.mxu0 %v85
    %227 = vmatpush.msra.mxu0 %v81
    %228 = vmatmul.f32.gmra.mxu0 %v107
    %v229 = vpop.f32.mrf.mxu0
    %v230 = vadd.f32 %v99, %v229
    %231 = vmatmul.f32.gmra.mxu0 %v110
    %v232 = vpop.f32.mrf.mxu0
    %v233 = vadd.f32 %v99, %v232
    %234 = vmatmul.f32.gmra.mxu0 %v113
    %v235 = vpop.f32.mrf.mxu0
    %v236 = vadd.f32 %v99, %v235
    %237 = vmatmul.f32.gmra.mxu0 %v116
    %v238 = vpop.f32.mrf.mxu0
    %v239 = vadd.f32 %v99, %v238
    %240 = vmatmul.f32.gmra.mxu0 %v119
    %v241 = vpop.f32.mrf.mxu0
    %v242 = vadd.f32 %v99, %v241
    %243 = vmatmul.f32.gmra.mxu0 %v122
    %v244 = vpop.f32.mrf.mxu0
    %v245 = vadd.f32 %v99, %v244
    %246 = vmatmul.f32.gmra.mxu0 %v125
    %v247 = vpop.f32.mrf.mxu0
    %v248 = vadd.f32 %v99, %v247
    %249 = vmatmul.f32.gmra.mxu0 %v128
    %v250 = vpop.f32.mrf.mxu0
    %v251 = vadd.f32 %v99, %v250
    %252 = vdwg.mxu0
    %253 = vmatpush.msra.mxu0 0.0
    %254 = vmatpush.msra.mxu0 0.0
    %255 = vmatpush.msra.mxu0 0.0
    %256 = vmatpush.msra.mxu0 0.0
    %257 = vmatpush.msra.mxu0 0.0
    %258 = vmatpush.msra.mxu0 0.0
    %259 = vmatpush.msra.mxu0 0.0
    %260 = vmatpush.msra.mxu0 0.0
    %261 = vmatpush.msra.mxu0 0.0
    %262 = vmatpush.msra.mxu0 0.0
    %263 = vmatpush.msra.mxu0 0.0
    %264 = vmatpush.msra.mxu0 0.0
    %265 = vmatpush.msra.mxu0 %v94
    %266 = vmatpush.msra.mxu0 %v90
    %267 = vmatpush.msra.mxu0 %v86
    %268 = vmatpush.msra.mxu0 %v82
    %269 = vmatmul.f32.gmra.mxu0 %v107
    %v270 = vpop.f32.mrf.mxu0
    %v271 = vadd.f32 %v100, %v270
    %272 = vmatmul.f32.gmra.mxu0 %v110
    %v273 = vpop.f32.mrf.mxu0
    %v274 = vadd.f32 %v100, %v273
    %275 = vmatmul.f32.gmra.mxu0 %v113
    %v276 = vpop.f32.mrf.mxu0
    %v277 = vadd.f32 %v100, %v276
    %278 = vmatmul.f32.gmra.mxu0 %v116
    %v279 = vpop.f32.mrf.mxu0
    %v280 = vadd.f32 %v100, %v279
    %281 = vmatmul.f32.gmra.mxu0 %v119
    %v282 = vpop.f32.mrf.mxu0
    %v283 = vadd.f32 %v100, %v282
    %284 = vmatmul.f32.gmra.mxu0 %v122
    %v285 = vpop.f32.mrf.mxu0
    %v286 = vadd.f32 %v100, %v285
    %287 = vmatmul.f32.gmra.mxu0 %v125
    %v288 = vpop.f32.mrf.mxu0
    %v289 = vadd.f32 %v100, %v288
    %290 = vmatmul.f32.gmra.mxu0 %v128
    %v291 = vpop.f32.mrf.mxu0
    %v292 = vadd.f32 %v100, %v291
    %293 = vdwg.mxu0
    %294 = vst [vmem:[#allocation2] sm:$0xff] %v148
    %295 = vst [vmem:[#allocation2 + $0x8] sm:$0xff] %v189
    %296 = vst [vmem:[#allocation2 + $0x10] sm:$0xff] %v230
    %297 = vst [vmem:[#allocation2 + $0x18] sm:$0xff] %v271
    %298 = vst [vmem:[#allocation2 + $0x20] sm:$0xff] %v151
    %299 = vst [vmem:[#allocation2 + $0x28] sm:$0xff] %v192
    %300 = vst [vmem:[#allocation2 + $0x30] sm:$0xff] %v233
    %301 = vst [vmem:[#allocation2 + $0x38] sm:$0xff] %v274
    %302 = vst [vmem:[#allocation2 + $0x40] sm:$0xff] %v154
    %303 = vst [vmem:[#allocation2 + $0x48] sm:$0xff] %v195
    %304 = vst [vmem:[#allocation2 + $0x50] sm:$0xff] %v236
    %305 = vst [vmem:[#allocation2 + $0x58] sm:$0xff] %v277
    %306 = vst [vmem:[#allocation2 + $0x60] sm:$0xff] %v157
    %307 = vst [vmem:[#allocation2 + $0x68] sm:$0xff] %v198
    %308 = vst [vmem:[#allocation2 + $0x70] sm:$0xff] %v239
    %309 = vst [vmem:[#allocation2 + $0x78] sm:$0xff] %v280
    %310 = vst [vmem:[#allocation2 + $0x80] sm:$0xff] %v160
    %311 = vst [vmem:[#allocation2 + $0x88] sm:$0xff] %v201
    %312 = vst [vmem:[#allocation2 + $0x90] sm:$0xff] %v242
    %313 = vst [vmem:[#allocation2 + $0x98] sm:$0xff] %v283
    %314 = vst [vmem:[#allocation2 + $0xa0] sm:$0xff] %v163
    %315 = vst [vmem:[#allocation2 + $0xa8] sm:$0xff] %v204
    %316 = vst [vmem:[#allocation2 + $0xb0] sm:$0xff] %v245
    %317 = vst [vmem:[#allocation2 + $0xb8] sm:$0xff] %v286
    %318 = vst [vmem:[#allocation2 + $0xc0] sm:$0xff] %v166
    %319 = vst [vmem:[#allocation2 + $0xc8] sm:$0xff] %v207
    %320 = vst [vmem:[#allocation2 + $0xd0] sm:$0xff] %v248
    %321 = vst [vmem:[#allocation2 + $0xd8] sm:$0xff] %v289
    %322 = vst [vmem:[#allocation2 + $0xe0] sm:$0xff] %v169
    %323 = vst [vmem:[#allocation2 + $0xe8] sm:$0xff] %v210
    %324 = vst [vmem:[#allocation2 + $0xf0] sm:$0xff] %v251
    %325 = vst [vmem:[#allocation2 + $0xf8] sm:$0xff] %v292
    %v326 = vld [vmem:[#allocation6] sm:$0xff]
    %v327 = vld [vmem:[#allocation6 + $0x8] sm:$0xff]
    %v328 = vld [vmem:[#allocation6 + $0x10] sm:$0xff]
    %v329 = vld [vmem:[#allocation6 + $0x18] sm:$0xff]
    %v330 = vld [vmem:[#allocation6 + $0x20] sm:$0xff]
    %v331 = vld [vmem:[#allocation6 + $0x28] sm:$0xff]
    %v332 = vld [vmem:[#allocation6 + $0x30] sm:$0xff]
    %v333 = vld [vmem:[#allocation6 + $0x38] sm:$0xff]
    %v334 = vld [vmem:[#allocation6 + $0x40] sm:$0xff]
    %v335 = vld [vmem:[#allocation6 + $0x48] sm:$0xff]
    %v336 = vld [vmem:[#allocation6 + $0x50] sm:$0xff]
    %v337 = vld [vmem:[#allocation6 + $0x58] sm:$0xff]
    %v338 = vld [vmem:[#allocation6 + $0x60] sm:$0xff]
    %v339 = vld [vmem:[#allocation6 + $0x68] sm:$0xff]
    %v340 = vld [vmem:[#allocation6 + $0x70] sm:$0xff]
    %v341 = vld [vmem:[#allocation6 + $0x78] sm:$0xff]
    %v342 = vld [vmem:[#allocation6 + $0x80] sm:$0xff]
    %v343 = vld [vmem:[#allocation6 + $0x88] sm:$0xff]
    %v344 = vld [vmem:[#allocation6 + $0x90] sm:$0xff]
    %v345 = vld [vmem:[#allocation6 + $0x98] sm:$0xff]
    %v346 = vld [vmem:[#allocation6 + $0xa0] sm:$0xff]
    %v347 = vld [vmem:[#allocation6 + $0xa8] sm:$0xff]
    %v348 = vld [vmem:[#allocation6 + $0xb0] sm:$0xff]
    %v349 = vld [vmem:[#allocation6 + $0xb8] sm:$0xff]
    %v350 = vld [vmem:[#allocation6 + $0xc0] sm:$0xff]
    %v351 = vld [vmem:[#allocation6 + $0xc8] sm:$0xff]
    %v352 = vld [vmem:[#allocation6 + $0xd0] sm:$0xff]
    %v353 = vld [vmem:[#allocation6 + $0xd8] sm:$0xff]
    %v354 = vld [vmem:[#allocation6 + $0xe0] sm:$0xff]
    %v355 = vld [vmem:[#allocation6 + $0xe8] sm:$0xff]
    %v356 = vld [vmem:[#allocation6 + $0xf0] sm:$0xff]
    %v357 = vld [vmem:[#allocation6 + $0xf8] sm:$0xff]
    %v358 = vld [vmem:[#allocation6 + $0x100] sm:$0xff]
    %v359 = vld [vmem:[#allocation6 + $0x108] sm:$0xff]
    %v360 = vld [vmem:[#allocation6 + $0x110] sm:$0xff]
    %v361 = vld [vmem:[#allocation6 + $0x118] sm:$0xff]
    %v362 = vld [vmem:[#allocation6 + $0x120] sm:$0xff]
    %v363 = vld [vmem:[#allocation6 + $0x128] sm:$0xff]
    %v364 = vld [vmem:[#allocation6 + $0x130] sm:$0xff]
    %v365 = vld [vmem:[#allocation6 + $0x138] sm:$0xff]
    %v366 = vld [vmem:[#allocation6 + $0x140] sm:$0xff]
    %v367 = vld [vmem:[#allocation6 + $0x148] sm:$0xff]
    %v368 = vld [vmem:[#allocation6 + $0x150] sm:$0xff]
    %v369 = vld [vmem:[#allocation6 + $0x158] sm:$0xff]
    %v370 = vld [vmem:[#allocation6 + $0x160] sm:$0xff]
    %v371 = vld [vmem:[#allocation6 + $0x168] sm:$0xff]
    %v372 = vld [vmem:[#allocation6 + $0x170] sm:$0xff]
    %v373 = vld [vmem:[#allocation6 + $0x178] sm:$0xff]
    %v374 = vld [vmem:[#allocation6 + $0x180] sm:$0xff]
    %v375 = vld [vmem:[#allocation6 + $0x188] sm:$0xff]
    %v376 = vld [vmem:[#allocation6 + $0x190] sm:$0xff]
    %v377 = vld [vmem:[#allocation6 + $0x198] sm:$0xff]
    %v378 = vld [vmem:[#allocation6 + $0x1a0] sm:$0xff]
    %v379 = vld [vmem:[#allocation6 + $0x1a8] sm:$0xff]
    %v380 = vld [vmem:[#allocation6 + $0x1b0] sm:$0xff]
    %v381 = vld [vmem:[#allocation6 + $0x1b8] sm:$0xff]
    %v382 = vld [vmem:[#allocation6 + $0x1c0] sm:$0xff]
    %v383 = vld [vmem:[#allocation6 + $0x1c8] sm:$0xff]
    %v384 = vld [vmem:[#allocation6 + $0x1d0] sm:$0xff]
    %v385 = vld [vmem:[#allocation6 + $0x1d8] sm:$0xff]
    %v386 = vld [vmem:[#allocation6 + $0x1e0] sm:$0xff]
    %v387 = vld [vmem:[#allocation6 + $0x1e8] sm:$0xff]
    %v388 = vld [vmem:[#allocation6 + $0x1f0] sm:$0xff]
    %v389 = vld [vmem:[#allocation6 + $0x1f8] sm:$0xff]
    %s390 = smul.u32 0, 4
    %s391 = smul.addr %s390, 8
    %s392 = scalar_lea.vmem [#allocation2], %s391
    %v393 = vld [vmem:[%s392] sm:$0xff]
    %v394 = vld [vmem:[%s392 + $0x8] sm:$0xff]
    %v395 = vld [vmem:[%s392 + $0x10] sm:$0xff]
    %v396 = vld [vmem:[%s392 + $0x18] sm:$0xff]
    %397 = vmatpush.msra.mxu0 %v386
    %398 = vmatpush.msra.mxu0 %v382
    %399 = vmatpush.msra.mxu0 %v378
    %400 = vmatpush.msra.mxu0 %v374
    %401 = vmatpush.msra.mxu0 %v370
    %402 = vmatpush.msra.mxu0 %v366
    %403 = vmatpush.msra.mxu0 %v362
    %404 = vmatpush.msra.mxu0 %v358
    %405 = vmatpush.msra.mxu0 %v354
    %406 = vmatpush.msra.mxu0 %v350
    %407 = vmatpush.msra.mxu0 %v346
    %408 = vmatpush.msra.mxu0 %v342
    %409 = vmatpush.msra.mxu0 %v338
    %410 = vmatpush.msra.mxu0 %v334
    %411 = vmatpush.msra.mxu0 %v330
    %412 = vmatpush.msra.mxu0 %v326
    %413 = vmatmul.f32.gmra.mxu0 0.0
    %v414 = vpop.f32.mrf.mxu0
    %v415 = vadd.f32 0.0, %v414
    %416 = vdwg.mxu0
    %417 = vmatpush.msra.mxu0 %v387
    %418 = vmatpush.msra.mxu0 %v383
    %419 = vmatpush.msra.mxu0 %v379
    %420 = vmatpush.msra.mxu0 %v375
    %421 = vmatpush.msra.mxu0 %v371
    %422 = vmatpush.msra.mxu0 %v367
    %423 = vmatpush.msra.mxu0 %v363
    %424 = vmatpush.msra.mxu0 %v359
    %425 = vmatpush.msra.mxu0 %v355
    %426 = vmatpush.msra.mxu0 %v351
    %427 = vmatpush.msra.mxu0 %v347
    %428 = vmatpush.msra.mxu0 %v343
    %429 = vmatpush.msra.mxu0 %v339
    %430 = vmatpush.msra.mxu0 %v335
    %431 = vmatpush.msra.mxu0 %v331
    %432 = vmatpush.msra.mxu0 %v327
    %433 = vmatmul.f32.gmra.mxu0 0.0
    %v434 = vpop.f32.mrf.mxu0
    %v435 = vadd.f32 0.0, %v434
    %436 = vdwg.mxu0
    %437 = vmatpush.msra.mxu0 %v388
    %438 = vmatpush.msra.mxu0 %v384
    %439 = vmatpush.msra.mxu0 %v380
    %440 = vmatpush.msra.mxu0 %v376
    %441 = vmatpush.msra.mxu0 %v372
    %442 = vmatpush.msra.mxu0 %v368
    %443 = vmatpush.msra.mxu0 %v364
    %444 = vmatpush.msra.mxu0 %v360
    %445 = vmatpush.msra.mxu0 %v356
    %446 = vmatpush.msra.mxu0 %v352
    %447 = vmatpush.msra.mxu0 %v348
    %448 = vmatpush.msra.mxu0 %v344
    %449 = vmatpush.msra.mxu0 %v340
    %450 = vmatpush.msra.mxu0 %v336
    %451 = vmatpush.msra.mxu0 %v332
    %452 = vmatpush.msra.mxu0 %v328
    %453 = vmatmul.f32.gmra.mxu0 0.0
    %v454 = vpop.f32.mrf.mxu0
    %v455 = vadd.f32 0.0, %v454
    %456 = vdwg.mxu0
    %457 = vmatpush.msra.mxu0 %v389
    %458 = vmatpush.msra.mxu0 %v385
    %459 = vmatpush.msra.mxu0 %v381
    %460 = vmatpush.msra.mxu0 %v377
    %461 = vmatpush.msra.mxu0 %v373
    %462 = vmatpush.msra.mxu0 %v369
    %463 = vmatpush.msra.mxu0 %v365
    %464 = vmatpush.msra.mxu0 %v361
    %465 = vmatpush.msra.mxu0 %v357
    %466 = vmatpush.msra.mxu0 %v353
    %467 = vmatpush.msra.mxu0 %v349
    %468 = vmatpush.msra.mxu0 %v345
    %469 = vmatpush.msra.mxu0 %v341
    %470 = vmatpush.msra.mxu0 %v337
    %471 = vmatpush.msra.mxu0 %v333
    %472 = vmatpush.msra.mxu0 %v329
    %473 = vmatmul.f32.gmra.mxu0 0.0
    %v474 = vpop.f32.mrf.mxu0
    %v475 = vadd.f32 0.0, %v474
    %476 = vdwg.mxu0
    %v477 = vadd.f32 %v393, %v415
    %v478 = vadd.f32 %v394, %v435
    %v479 = vadd.f32 %v395, %v455
    %v480 = vadd.f32 %v396, %v475
    %v481 = vxor.u32 %v477, 2147483648
    %v482 = vmul.f32 %v481, 1.442695
    %v483 = vpow.pop %v482
    %v484 = vadd.f32 %v483, 1.0
    %v485 = vrcp.pop %v484
    %v486 = vmul.f32 %v484, %v485
    %v487 = vsub.f32 1.0, %v486
    %v488 = vmul.f32 %v485, %v487
    %v489 = vadd.f32 %v485, %v488
    %vm490 = vweird.f32 %v484
    %vm491 = vweird.f32 %v485
    %vm492 = vmor %vm490, %vm491
    %v493 = vsel %vm492, %v485, %v489
    %v494 = vand.u32 2147483647, %v484
    %vm495 = vcmp.eq.f32.partialorder %v494, 8.507059e+37
    %v496 = vand.u32 %v484, 2147483648
    %v497 = vor.u32 1.1754944e-38, %v496
    %v498 = vsel %vm495, %v497, %v493
    %v499 = vmul.f32 1.0, %v498
    %v500 = vxor.u32 %v478, 2147483648
    %v501 = vmul.f32 %v500, 1.442695
    %v502 = vpow.pop %v501
    %v503 = vadd.f32 %v502, 1.0
    %v504 = vrcp.pop %v503
    %v505 = vmul.f32 %v503, %v504
    %v506 = vsub.f32 1.0, %v505
    %v507 = vmul.f32 %v504, %v506
    %v508 = vadd.f32 %v504, %v507
    %vm509 = vweird.f32 %v503
    %vm510 = vweird.f32 %v504
    %vm511 = vmor %vm509, %vm510
    %v512 = vsel %vm511, %v504, %v508
    %v513 = vand.u32 2147483647, %v503
    %vm514 = vcmp.eq.f32.partialorder %v513, 8.507059e+37
    %v515 = vand.u32 %v503, 2147483648
    %v516 = vor.u32 1.1754944e-38, %v515
    %v517 = vsel %vm514, %v516, %v512
    %v518 = vmul.f32 1.0, %v517
    %v519 = vtanh.pop %v479
    %v520 = vxor.u32 %v480, 2147483648
    %v521 = vmul.f32 %v520, 1.442695
    %v522 = vpow.pop %v521
    %v523 = vadd.f32 %v522, 1.0
    %v524 = vrcp.pop %v523
    %v525 = vmul.f32 %v523, %v524
    %v526 = vsub.f32 1.0, %v525
    %v527 = vmul.f32 %v524, %v526
    %v528 = vadd.f32 %v524, %v527
    %vm529 = vweird.f32 %v523
    %vm530 = vweird.f32 %v524
    %vm531 = vmor %vm529, %vm530
    %v532 = vsel %vm531, %v524, %v528
    %v533 = vand.u32 2147483647, %v523
    %vm534 = vcmp.eq.f32.partialorder %v533, 8.507059e+37
    %v535 = vand.u32 %v523, 2147483648
    %v536 = vor.u32 1.1754944e-38, %v535
    %v537 = vsel %vm534, %v536, %v532
    %v538 = vmul.f32 1.0, %v537
    %v539 = vmul.f32 %v518, 0.0
    %v540 = vmul.f32 %v499, %v519
    %v541 = vadd.f32 %v539, %v540
    %v542 = vtanh.pop %v541
    %v543 = vmul.f32 %v538, %v542
    %s544 = smul.u32 1, 4
    %s545 = smul.addr %s544, 8
    %s546 = scalar_lea.vmem [#allocation2], %s545
    %v547 = vld [vmem:[%s546] sm:$0xff]
    %v548 = vld [vmem:[%s546 + $0x8] sm:$0xff]
    %v549 = vld [vmem:[%s546 + $0x10] sm:$0xff]
    %v550 = vld [vmem:[%s546 + $0x18] sm:$0xff]
    %551 = vmatpush.msra.mxu0 %v386
    %552 = vmatpush.msra.mxu0 %v382
    %553 = vmatpush.msra.mxu0 %v378
    %554 = vmatpush.msra.mxu0 %v374
    %555 = vmatpush.msra.mxu0 %v370
    %556 = vmatpush.msra.mxu0 %v366
    %557 = vmatpush.msra.mxu0 %v362
    %558 = vmatpush.msra.mxu0 %v358
    %559 = vmatpush.msra.mxu0 %v354
    %560 = vmatpush.msra.mxu0 %v350
    %561 = vmatpush.msra.mxu0 %v346
    %562 = vmatpush.msra.mxu0 %v342
    %563 = vmatpush.msra.mxu0 %v338
    %564 = vmatpush.msra.mxu0 %v334
    %565 = vmatpush.msra.mxu0 %v330
    %566 = vmatpush.msra.mxu0 %v326
    %567 = vmatmul.f32.gmra.mxu0 %v543
    %v568 = vpop.f32.mrf.mxu0
    %v569 = vadd.f32 0.0, %v568
    %570 = vdwg.mxu0
    %571 = vmatpush.msra.mxu0 %v387
    %572 = vmatpush.msra.mxu0 %v383
    %573 = vmatpush.msra.mxu0 %v379
    %574 = vmatpush.msra.mxu0 %v375
    %575 = vmatpush.msra.mxu0 %v371
    %576 = vmatpush.msra.mxu0 %v367
    %577 = vmatpush.msra.mxu0 %v363
    %578 = vmatpush.msra.mxu0 %v359
    %579 = vmatpush.msra.mxu0 %v355
    %580 = vmatpush.msra.mxu0 %v351
    %581 = vmatpush.msra.mxu0 %v347
    %582 = vmatpush.msra.mxu0 %v343
    %583 = vmatpush.msra.mxu0 %v339
    %584 = vmatpush.msra.mxu0 %v335
    %585 = vmatpush.msra.mxu0 %v331
    %586 = vmatpush.msra.mxu0 %v327
    %587 = vmatmul.f32.gmra.mxu0 %v543
    %v588 = vpop.f32.mrf.mxu0
    %v589 = vadd.f32 0.0, %v588
    %590 = vdwg.mxu0
    %591 = vmatpush.msra.mxu0 %v388
    %592 = vmatpush.msra.mxu0 %v384
    %593 = vmatpush.msra.mxu0 %v380
    %594 = vmatpush.msra.mxu0 %v376
    %595 = vmatpush.msra.mxu0 %v372
    %596 = vmatpush.msra.mxu0 %v368
    %597 = vmatpush.msra.mxu0 %v364
    %598 = vmatpush.msra.mxu0 %v360
    %599 = vmatpush.msra.mxu0 %v356
    %600 = vmatpush.msra.mxu0 %v352
    %601 = vmatpush.msra.mxu0 %v348
    %602 = vmatpush.msra.mxu0 %v344
    %603 = vmatpush.msra.mxu0 %v340
    %604 = vmatpush.msra.mxu0 %v336
    %605 = vmatpush.msra.mxu0 %v332
    %606 = vmatpush.msra.mxu0 %v328
    %607 = vmatmul.f32.gmra.mxu0 %v543
    %v608 = vpop.f32.mrf.mxu0
    %v609 = vadd.f32 0.0, %v608
    %610 = vdwg.mxu0
    %611 = vmatpush.msra.mxu0 %v389
    %612 = vmatpush.msra.mxu0 %v385
    %613 = vmatpush.msra.mxu0 %v381
    %614 = vmatpush.msra.mxu0 %v377
    %615 = vmatpush.msra.mxu0 %v373
    %616 = vmatpush.msra.mxu0 %v369
    %617 = vmatpush.msra.mxu0 %v365
    %618 = vmatpush.msra.mxu0 %v361
    %619 = vmatpush.msra.mxu0 %v357
    %620 = vmatpush.msra.mxu0 %v353
    %621 = vmatpush.msra.mxu0 %v349
    %622 = vmatpush.msra.mxu0 %v345
    %623 = vmatpush.msra.mxu0 %v341
    %624 = vmatpush.msra.mxu0 %v337
    %625 = vmatpush.msra.mxu0 %v333
    %626 = vmatpush.msra.mxu0 %v329
    %627 = vmatmul.f32.gmra.mxu0 %v543
    %v628 = vpop.f32.mrf.mxu0
    %v629 = vadd.f32 0.0, %v628
    %630 = vdwg.mxu0
    %v631 = vadd.f32 %v547, %v569
    %v632 = vadd.f32 %v548, %v589
    %v633 = vadd.f32 %v549, %v609
    %v634 = vadd.f32 %v550, %v629
    %v635 = vxor.u32 %v631, 2147483648
    %v636 = vmul.f32 %v635, 1.442695
    %v637 = vpow.pop %v636
    %v638 = vadd.f32 %v637, 1.0
    %v639 = vrcp.pop %v638
    %v640 = vmul.f32 %v638, %v639
    %v641 = vsub.f32 1.0, %v640
    %v642 = vmul.f32 %v639, %v641
    %v643 = vadd.f32 %v639, %v642
    %vm644 = vweird.f32 %v638
    %vm645 = vweird.f32 %v639
    %vm646 = vmor %vm644, %vm645
    %v647 = vsel %vm646, %v639, %v643
    %v648 = vand.u32 2147483647, %v638
    %vm649 = vcmp.eq.f32.partialorder %v648, 8.507059e+37
    %v650 = vand.u32 %v638, 2147483648
    %v651 = vor.u32 1.1754944e-38, %v650
    %v652 = vsel %vm649, %v651, %v647
    %v653 = vmul.f32 1.0, %v652
    %v654 = vxor.u32 %v632, 2147483648
    %v655 = vmul.f32 %v654, 1.442695
    %v656 = vpow.pop %v655
    %v657 = vadd.f32 %v656, 1.0
    %v658 = vrcp.pop %v657
    %v659 = vmul.f32 %v657, %v658
    %v660 = vsub.f32 1.0, %v659
    %v661 = vmul.f32 %v658, %v660
    %v662 = vadd.f32 %v658, %v661
    %vm663 = vweird.f32 %v657
    %vm664 = vweird.f32 %v658
    %vm665 = vmor %vm663, %vm664
    %v666 = vsel %vm665, %v658, %v662
    %v667 = vand.u32 2147483647, %v657
    %vm668 = vcmp.eq.f32.partialorder %v667, 8.507059e+37
    %v669 = vand.u32 %v657, 2147483648
    %v670 = vor.u32 1.1754944e-38, %v669
    %v671 = vsel %vm668, %v670, %v666
    %v672 = vmul.f32 1.0, %v671
    %v673 = vtanh.pop %v633
    %v674 = vxor.u32 %v634, 2147483648
    %v675 = vmul.f32 %v674, 1.442695
    %v676 = vpow.pop %v675
    %v677 = vadd.f32 %v676, 1.0
    %v678 = vrcp.pop %v677
    %v679 = vmul.f32 %v677, %v678
    %v680 = vsub.f32 1.0, %v679
    %v681 = vmul.f32 %v678, %v680
    %v682 = vadd.f32 %v678, %v681
    %vm683 = vweird.f32 %v677
    %vm684 = vweird.f32 %v678
    %vm685 = vmor %vm683, %vm684
    %v686 = vsel %vm685, %v678, %v682
    %v687 = vand.u32 2147483647, %v677
    %vm688 = vcmp.eq.f32.partialorder %v687, 8.507059e+37
    %v689 = vand.u32 %v677, 2147483648
    %v690 = vor.u32 1.1754944e-38, %v689
    %v691 = vsel %vm688, %v690, %v686
    %v692 = vmul.f32 1.0, %v691
    %v693 = vmul.f32 %v672, %v541
    %v694 = vmul.f32 %v653, %v673
    %v695 = vadd.f32 %v693, %v694
    %v696 = vtanh.pop %v695
    %v697 = vmul.f32 %v692, %v696
    %s698 = smul.u32 2, 4
    %s699 = smul.addr %s698, 8
    %s700 = scalar_lea.vmem [#allocation2], %s699
    %v701 = vld [vmem:[%s700] sm:$0xff]
    %v702 = vld [vmem:[%s700 + $0x8] sm:$0xff]
    %v703 = vld [vmem:[%s700 + $0x10] sm:$0xff]
    %v704 = vld [vmem:[%s700 + $0x18] sm:$0xff]
    %705 = vmatpush.msra.mxu0 %v386
    %706 = vmatpush.msra.mxu0 %v382
    %707 = vmatpush.msra.mxu0 %v378
    %708 = vmatpush.msra.mxu0 %v374
    %709 = vmatpush.msra.mxu0 %v370
    %710 = vmatpush.msra.mxu0 %v366
    %711 = vmatpush.msra.mxu0 %v362
    %712 = vmatpush.msra.mxu0 %v358
    %713 = vmatpush.msra.mxu0 %v354
    %714 = vmatpush.msra.mxu0 %v350
    %715 = vmatpush.msra.mxu0 %v346
    %716 = vmatpush.msra.mxu0 %v342
    %717 = vmatpush.msra.mxu0 %v338
    %718 = vmatpush.msra.mxu0 %v334
    %719 = vmatpush.msra.mxu0 %v330
    %720 = vmatpush.msra.mxu0 %v326
    %721 = vmatmul.f32.gmra.mxu0 %v697
    %v722 = vpop.f32.mrf.mxu0
    %v723 = vadd.f32 0.0, %v722
    %724 = vdwg.mxu0
    %725 = vmatpush.msra.mxu0 %v387
    %726 = vmatpush.msra.mxu0 %v383
    %727 = vmatpush.msra.mxu0 %v379
    %728 = vmatpush.msra.mxu0 %v375
    %729 = vmatpush.msra.mxu0 %v371
    %730 = vmatpush.msra.mxu0 %v367
    %731 = vmatpush.msra.mxu0 %v363
    %732 = vmatpush.msra.mxu0 %v359
    %733 = vmatpush.msra.mxu0 %v355
    %734 = vmatpush.msra.mxu0 %v351
    %735 = vmatpush.msra.mxu0 %v347
    %736 = vmatpush.msra.mxu0 %v343
    %737 = vmatpush.msra.mxu0 %v339
    %738 = vmatpush.msra.mxu0 %v335
    %739 = vmatpush.msra.mxu0 %v331
    %740 = vmatpush.msra.mxu0 %v327
    %741 = vmatmul.f32.gmra.mxu0 %v697
    %v742 = vpop.f32.mrf.mxu0
    %v743 = vadd.f32 0.0, %v742
    %744 = vdwg.mxu0
    %745 = vmatpush.msra.mxu0 %v388
    %746 = vmatpush.msra.mxu0 %v384
    %747 = vmatpush.msra.mxu0 %v380
    %748 = vmatpush.msra.mxu0 %v376
    %749 = vmatpush.msra.mxu0 %v372
    %750 = vmatpush.msra.mxu0 %v368
    %751 = vmatpush.msra.mxu0 %v364
    %752 = vmatpush.msra.mxu0 %v360
    %753 = vmatpush.msra.mxu0 %v356
    %754 = vmatpush.msra.mxu0 %v352
    %755 = vmatpush.msra.mxu0 %v348
    %756 = vmatpush.msra.mxu0 %v344
    %757 = vmatpush.msra.mxu0 %v340
    %758 = vmatpush.msra.mxu0 %v336
    %759 = vmatpush.msra.mxu0 %v332
    %760 = vmatpush.msra.mxu0 %v328
    %761 = vmatmul.f32.gmra.mxu0 %v697
    %v762 = vpop.f32.mrf.mxu0
    %v763 = vadd.f32 0.0, %v762
    %764 = vdwg.mxu0
    %765 = vmatpush.msra.mxu0 %v389
    %766 = vmatpush.msra.mxu0 %v385
    %767 = vmatpush.msra.mxu0 %v381
    %768 = vmatpush.msra.mxu0 %v377
    %769 = vmatpush.msra.mxu0 %v373
    %770 = vmatpush.msra.mxu0 %v369
    %771 = vmatpush.msra.mxu0 %v365
    %772 = vmatpush.msra.mxu0 %v361
    %773 = vmatpush.msra.mxu0 %v357
    %774 = vmatpush.msra.mxu0 %v353
    %775 = vmatpush.msra.mxu0 %v349
    %776 = vmatpush.msra.mxu0 %v345
    %777 = vmatpush.msra.mxu0 %v341
    %778 = vmatpush.msra.mxu0 %v337
    %779 = vmatpush.msra.mxu0 %v333
    %780 = vmatpush.msra.mxu0 %v329
    %781 = vmatmul.f32.gmra.mxu0 %v697
    %v782 = vpop.f32.mrf.mxu0
    %v783 = vadd.f32 0.0, %v782
    %784 = vdwg.mxu0
    %v785 = vadd.f32 %v701, %v723
    %v786 = vadd.f32 %v702, %v743
    %v787 = vadd.f32 %v703, %v763
    %v788 = vadd.f32 %v704, %v783
    %v789 = vxor.u32 %v785, 2147483648
    %v790 = vmul.f32 %v789, 1.442695
    %v791 = vpow.pop %v790
    %v792 = vadd.f32 %v791, 1.0
    %v793 = vrcp.pop %v792
    %v794 = vmul.f32 %v792, %v793
    %v795 = vsub.f32 1.0, %v794
    %v796 = vmul.f32 %v793, %v795
    %v797 = vadd.f32 %v793, %v796
    %vm798 = vweird.f32 %v792
    %vm799 = vweird.f32 %v793
    %vm800 = vmor %vm798, %vm799
    %v801 = vsel %vm800, %v793, %v797
    %v802 = vand.u32 2147483647, %v792
    %vm803 = vcmp.eq.f32.partialorder %v802, 8.507059e+37
    %v804 = vand.u32 %v792, 2147483648
    %v805 = vor.u32 1.1754944e-38, %v804
    %v806 = vsel %vm803, %v805, %v801
    %v807 = vmul.f32 1.0, %v806
    %v808 = vxor.u32 %v786, 2147483648
    %v809 = vmul.f32 %v808, 1.442695
    %v810 = vpow.pop %v809
    %v811 = vadd.f32 %v810, 1.0
    %v812 = vrcp.pop %v811
    %v813 = vmul.f32 %v811, %v812
    %v814 = vsub.f32 1.0, %v813
    %v815 = vmul.f32 %v812, %v814
    %v816 = vadd.f32 %v812, %v815
    %vm817 = vweird.f32 %v811
    %vm818 = vweird.f32 %v812
    %vm819 = vmor %vm817, %vm818
    %v820 = vsel %vm819, %v812, %v816
    %v821 = vand.u32 2147483647, %v811
    %vm822 = vcmp.eq.f32.partialorder %v821, 8.507059e+37
    %v823 = vand.u32 %v811, 2147483648
    %v824 = vor.u32 1.1754944e-38, %v823
    %v825 = vsel %vm822, %v824, %v820
    %v826 = vmul.f32 1.0, %v825
    %v827 = vtanh.pop %v787
    %v828 = vxor.u32 %v788, 2147483648
    %v829 = vmul.f32 %v828, 1.442695
    %v830 = vpow.pop %v829
    %v831 = vadd.f32 %v830, 1.0
    %v832 = vrcp.pop %v831
    %v833 = vmul.f32 %v831, %v832
    %v834 = vsub.f32 1.0, %v833
    %v835 = vmul.f32 %v832, %v834
    %v836 = vadd.f32 %v832, %v835
    %vm837 = vweird.f32 %v831
    %vm838 = vweird.f32 %v832
    %vm839 = vmor %vm837, %vm838
    %v840 = vsel %vm839, %v832, %v836
    %v841 = vand.u32 2147483647, %v831
    %vm842 = vcmp.eq.f32.partialorder %v841, 8.507059e+37
    %v843 = vand.u32 %v831, 2147483648
    %v844 = vor.u32 1.1754944e-38, %v843
    %v845 = vsel %vm842, %v844, %v840
    %v846 = vmul.f32 1.0, %v845
    %v847 = vmul.f32 %v826, %v695
    %v848 = vmul.f32 %v807, %v827
    %v849 = vadd.f32 %v847, %v848
    %v850 = vtanh.pop %v849
    %v851 = vmul.f32 %v846, %v850
    %s852 = smul.u32 3, 4
    %s853 = smul.addr %s852, 8
    %s854 = scalar_lea.vmem [#allocation2], %s853
    %v855 = vld [vmem:[%s854] sm:$0xff]
    %v856 = vld [vmem:[%s854 + $0x8] sm:$0xff]
    %v857 = vld [vmem:[%s854 + $0x10] sm:$0xff]
    %v858 = vld [vmem:[%s854 + $0x18] sm:$0xff]
    %859 = vmatpush.msra.mxu0 %v386
    %860 = vmatpush.msra.mxu0 %v382
    %861 = vmatpush.msra.mxu0 %v378
    %862 = vmatpush.msra.mxu0 %v374
    %863 = vmatpush.msra.mxu0 %v370
    %864 = vmatpush.msra.mxu0 %v366
    %865 = vmatpush.msra.mxu0 %v362
    %866 = vmatpush.msra.mxu0 %v358
    %867 = vmatpush.msra.mxu0 %v354
    %868 = vmatpush.msra.mxu0 %v350
    %869 = vmatpush.msra.mxu0 %v346
    %870 = vmatpush.msra.mxu0 %v342
    %871 = vmatpush.msra.mxu0 %v338
    %872 = vmatpush.msra.mxu0 %v334
    %873 = vmatpush.msra.mxu0 %v330
    %874 = vmatpush.msra.mxu0 %v326
    %875 = vmatmul.f32.gmra.mxu0 %v851
    %v876 = vpop.f32.mrf.mxu0
    %v877 = vadd.f32 0.0, %v876
    %878 = vdwg.mxu0
    %879 = vmatpush.msra.mxu0 %v387
    %880 = vmatpush.msra.mxu0 %v383
    %881 = vmatpush.msra.mxu0 %v379
    %882 = vmatpush.msra.mxu0 %v375
    %883 = vmatpush.msra.mxu0 %v371
    %884 = vmatpush.msra.mxu0 %v367
    %885 = vmatpush.msra.mxu0 %v363
    %886 = vmatpush.msra.mxu0 %v359
    %887 = vmatpush.msra.mxu0 %v355
    %888 = vmatpush.msra.mxu0 %v351
    %889 = vmatpush.msra.mxu0 %v347
    %890 = vmatpush.msra.mxu0 %v343
    %891 = vmatpush.msra.mxu0 %v339
    %892 = vmatpush.msra.mxu0 %v335
    %893 = vmatpush.msra.mxu0 %v331
    %894 = vmatpush.msra.mxu0 %v327
    %895 = vmatmul.f32.gmra.mxu0 %v851
    %v896 = vpop.f32.mrf.mxu0
    %v897 = vadd.f32 0.0, %v896
    %898 = vdwg.mxu0
    %899 = vmatpush.msra.mxu0 %v388
    %900 = vmatpush.msra.mxu0 %v384
    %901 = vmatpush.msra.mxu0 %v380
    %902 = vmatpush.msra.mxu0 %v376
    %903 = vmatpush.msra.mxu0 %v372
    %904 = vmatpush.msra.mxu0 %v368
    %905 = vmatpush.msra.mxu0 %v364
    %906 = vmatpush.msra.mxu0 %v360
    %907 = vmatpush.msra.mxu0 %v356
    %908 = vmatpush.msra.mxu0 %v352
    %909 = vmatpush.msra.mxu0 %v348
    %910 = vmatpush.msra.mxu0 %v344
    %911 = vmatpush.msra.mxu0 %v340
    %912 = vmatpush.msra.mxu0 %v336
    %913 = vmatpush.msra.mxu0 %v332
    %914 = vmatpush.msra.mxu0 %v328
    %915 = vmatmul.f32.gmra.mxu0 %v851
    %v916 = vpop.f32.mrf.mxu0
    %v917 = vadd.f32 0.0, %v916
    %918 = vdwg.mxu0
    %919 = vmatpush.msra.mxu0 %v389
    %920 = vmatpush.msra.mxu0 %v385
    %921 = vmatpush.msra.mxu0 %v381
    %922 = vmatpush.msra.mxu0 %v377
    %923 = vmatpush.msra.mxu0 %v373
    %924 = vmatpush.msra.mxu0 %v369
    %925 = vmatpush.msra.mxu0 %v365
    %926 = vmatpush.msra.mxu0 %v361
    %927 = vmatpush.msra.mxu0 %v357
    %928 = vmatpush.msra.mxu0 %v353
    %929 = vmatpush.msra.mxu0 %v349
    %930 = vmatpush.msra.mxu0 %v345
    %931 = vmatpush.msra.mxu0 %v341
    %932 = vmatpush.msra.mxu0 %v337
    %933 = vmatpush.msra.mxu0 %v333
    %934 = vmatpush.msra.mxu0 %v329
    %935 = vmatmul.f32.gmra.mxu0 %v851
    %v936 = vpop.f32.mrf.mxu0
    %v937 = vadd.f32 0.0, %v936
    %938 = vdwg.mxu0
    %v939 = vadd.f32 %v855, %v877
    %v940 = vadd.f32 %v856, %v897
    %v941 = vadd.f32 %v857, %v917
    %v942 = vadd.f32 %v858, %v937
    %v943 = vxor.u32 %v939, 2147483648
    %v944 = vmul.f32 %v943, 1.442695
    %v945 = vpow.pop %v944
    %v946 = vadd.f32 %v945, 1.0
    %v947 = vrcp.pop %v946
    %v948 = vmul.f32 %v946, %v947
    %v949 = vsub.f32 1.0, %v948
    %v950 = vmul.f32 %v947, %v949
    %v951 = vadd.f32 %v947, %v950
    %vm952 = vweird.f32 %v946
    %vm953 = vweird.f32 %v947
    %vm954 = vmor %vm952, %vm953
    %v955 = vsel %vm954, %v947, %v951
    %v956 = vand.u32 2147483647, %v946
    %vm957 = vcmp.eq.f32.partialorder %v956, 8.507059e+37
    %v958 = vand.u32 %v946, 2147483648
    %v959 = vor.u32 1.1754944e-38, %v958
    %v960 = vsel %vm957, %v959, %v955
    %v961 = vmul.f32 1.0, %v960
    %v962 = vxor.u32 %v940, 2147483648
    %v963 = vmul.f32 %v962, 1.442695
    %v964 = vpow.pop %v963
    %v965 = vadd.f32 %v964, 1.0
    %v966 = vrcp.pop %v965
    %v967 = vmul.f32 %v965, %v966
    %v968 = vsub.f32 1.0, %v967
    %v969 = vmul.f32 %v966, %v968
    %v970 = vadd.f32 %v966, %v969
    %vm971 = vweird.f32 %v965
    %vm972 = vweird.f32 %v966
    %vm973 = vmor %vm971, %vm972
    %v974 = vsel %vm973, %v966, %v970
    %v975 = vand.u32 2147483647, %v965
    %vm976 = vcmp.eq.f32.partialorder %v975, 8.507059e+37
    %v977 = vand.u32 %v965, 2147483648
    %v978 = vor.u32 1.1754944e-38, %v977
    %v979 = vsel %vm976, %v978, %v974
    %v980 = vmul.f32 1.0, %v979
    %v981 = vtanh.pop %v941
    %v982 = vxor.u32 %v942, 2147483648
    %v983 = vmul.f32 %v982, 1.442695
    %v984 = vpow.pop %v983
    %v985 = vadd.f32 %v984, 1.0
    %v986 = vrcp.pop %v985
    %v987 = vmul.f32 %v985, %v986
    %v988 = vsub.f32 1.0, %v987
    %v989 = vmul.f32 %v986, %v988
    %v990 = vadd.f32 %v986, %v989
    %vm991 = vweird.f32 %v985
    %vm992 = vweird.f32 %v986
    %vm993 = vmor %vm991, %vm992
    %v994 = vsel %vm993, %v986, %v990
    %v995 = vand.u32 2147483647, %v985
    %vm996 = vcmp.eq.f32.partialorder %v995, 8.507059e+37
    %v997 = vand.u32 %v985, 2147483648
    %v998 = vor.u32 1.1754944e-38, %v997
    %v999 = vsel %vm996, %v998, %v994
    %v1000 = vmul.f32 1.0, %v999
    %v1001 = vmul.f32 %v980, %v849
    %v1002 = vmul.f32 %v961, %v981
    %v1003 = vadd.f32 %v1001, %v1002
    %v1004 = vtanh.pop %v1003
    %v1005 = vmul.f32 %v1000, %v1004
    %s1006 = smul.u32 4, 4
    %s1007 = smul.addr %s1006, 8
    %s1008 = scalar_lea.vmem [#allocation2], %s1007
    %v1009 = vld [vmem:[%s1008] sm:$0xff]
    %v1010 = vld [vmem:[%s1008 + $0x8] sm:$0xff]
    %v1011 = vld [vmem:[%s1008 + $0x10] sm:$0xff]
    %v1012 = vld [vmem:[%s1008 + $0x18] sm:$0xff]
    %1013 = vmatpush.msra.mxu0 %v386
    %1014 = vmatpush.msra.mxu0 %v382
    %1015 = vmatpush.msra.mxu0 %v378
    %1016 = vmatpush.msra.mxu0 %v374
    %1017 = vmatpush.msra.mxu0 %v370
    %1018 = vmatpush.msra.mxu0 %v366
    %1019 = vmatpush.msra.mxu0 %v362
    %1020 = vmatpush.msra.mxu0 %v358
    %1021 = vmatpush.msra.mxu0 %v354
    %1022 = vmatpush.msra.mxu0 %v350
    %1023 = vmatpush.msra.mxu0 %v346
    %1024 = vmatpush.msra.mxu0 %v342
    %1025 = vmatpush.msra.mxu0 %v338
    %1026 = vmatpush.msra.mxu0 %v334
    %1027 = vmatpush.msra.mxu0 %v330
    %1028 = vmatpush.msra.mxu0 %v326
    %1029 = vmatmul.f32.gmra.mxu0 %v1005
    %v1030 = vpop.f32.mrf.mxu0
    %v1031 = vadd.f32 0.0, %v1030
    %1032 = vdwg.mxu0
    %1033 = vmatpush.msra.mxu0 %v387
    %1034 = vmatpush.msra.mxu0 %v383
    %1035 = vmatpush.msra.mxu0 %v379
    %1036 = vmatpush.msra.mxu0 %v375
    %1037 = vmatpush.msra.mxu0 %v371
    %1038 = vmatpush.msra.mxu0 %v367
    %1039 = vmatpush.msra.mxu0 %v363
    %1040 = vmatpush.msra.mxu0 %v359
    %1041 = vmatpush.msra.mxu0 %v355
    %1042 = vmatpush.msra.mxu0 %v351
    %1043 = vmatpush.msra.mxu0 %v347
    %1044 = vmatpush.msra.mxu0 %v343
    %1045 = vmatpush.msra.mxu0 %v339
    %1046 = vmatpush.msra.mxu0 %v335
    %1047 = vmatpush.msra.mxu0 %v331
    %1048 = vmatpush.msra.mxu0 %v327
    %1049 = vmatmul.f32.gmra.mxu0 %v1005
    %v1050 = vpop.f32.mrf.mxu0
    %v1051 = vadd.f32 0.0, %v1050
    %1052 = vdwg.mxu0
    %1053 = vmatpush.msra.mxu0 %v388
    %1054 = vmatpush.msra.mxu0 %v384
    %1055 = vmatpush.msra.mxu0 %v380
    %1056 = vmatpush.msra.mxu0 %v376
    %1057 = vmatpush.msra.mxu0 %v372
    %1058 = vmatpush.msra.mxu0 %v368
    %1059 = vmatpush.msra.mxu0 %v364
    %1060 = vmatpush.msra.mxu0 %v360
    %1061 = vmatpush.msra.mxu0 %v356
    %1062 = vmatpush.msra.mxu0 %v352
    %1063 = vmatpush.msra.mxu0 %v348
    %1064 = vmatpush.msra.mxu0 %v344
    %1065 = vmatpush.msra.mxu0 %v340
    %1066 = vmatpush.msra.mxu0 %v336
    %1067 = vmatpush.msra.mxu0 %v332
    %1068 = vmatpush.msra.mxu0 %v328
    %1069 = vmatmul.f32.gmra.mxu0 %v1005
    %v1070 = vpop.f32.mrf.mxu0
    %v1071 = vadd.f32 0.0, %v1070
    %1072 = vdwg.mxu0
    %1073 = vmatpush.msra.mxu0 %v389
    %1074 = vmatpush.msra.mxu0 %v385
    %1075 = vmatpush.msra.mxu0 %v381
    %1076 = vmatpush.msra.mxu0 %v377
    %1077 = vmatpush.msra.mxu0 %v373
    %1078 = vmatpush.msra.mxu0 %v369
    %1079 = vmatpush.msra.mxu0 %v365
    %1080 = vmatpush.msra.mxu0 %v361
    %1081 = vmatpush.msra.mxu0 %v357
    %1082 = vmatpush.msra.mxu0 %v353
    %1083 = vmatpush.msra.mxu0 %v349
    %1084 = vmatpush.msra.mxu0 %v345
    %1085 = vmatpush.msra.mxu0 %v341
    %1086 = vmatpush.msra.mxu0 %v337
    %1087 = vmatpush.msra.mxu0 %v333
    %1088 = vmatpush.msra.mxu0 %v329
    %1089 = vmatmul.f32.gmra.mxu0 %v1005
    %v1090 = vpop.f32.mrf.mxu0
    %v1091 = vadd.f32 0.0, %v1090
    %1092 = vdwg.mxu0
    %v1093 = vadd.f32 %v1009, %v1031
    %v1094 = vadd.f32 %v1010, %v1051
    %v1095 = vadd.f32 %v1011, %v1071
    %v1096 = vadd.f32 %v1012, %v1091
    %v1097 = vxor.u32 %v1093, 2147483648
    %v1098 = vmul.f32 %v1097, 1.442695
    %v1099 = vpow.pop %v1098
    %v1100 = vadd.f32 %v1099, 1.0
    %v1101 = vrcp.pop %v1100
    %v1102 = vmul.f32 %v1100, %v1101
    %v1103 = vsub.f32 1.0, %v1102
    %v1104 = vmul.f32 %v1101, %v1103
    %v1105 = vadd.f32 %v1101, %v1104
    %vm1106 = vweird.f32 %v1100
    %vm1107 = vweird.f32 %v1101
    %vm1108 = vmor %vm1106, %vm1107
    %v1109 = vsel %vm1108, %v1101, %v1105
    %v1110 = vand.u32 2147483647, %v1100
    %vm1111 = vcmp.eq.f32.partialorder %v1110, 8.507059e+37
    %v1112 = vand.u32 %v1100, 2147483648
    %v1113 = vor.u32 1.1754944e-38, %v1112
    %v1114 = vsel %vm1111, %v1113, %v1109
    %v1115 = vmul.f32 1.0, %v1114
    %v1116 = vxor.u32 %v1094, 2147483648
    %v1117 = vmul.f32 %v1116, 1.442695
    %v1118 = vpow.pop %v1117
    %v1119 = vadd.f32 %v1118, 1.0
    %v1120 = vrcp.pop %v1119
    %v1121 = vmul.f32 %v1119, %v1120
    %v1122 = vsub.f32 1.0, %v1121
    %v1123 = vmul.f32 %v1120, %v1122
    %v1124 = vadd.f32 %v1120, %v1123
    %vm1125 = vweird.f32 %v1119
    %vm1126 = vweird.f32 %v1120
    %vm1127 = vmor %vm1125, %vm1126
    %v1128 = vsel %vm1127, %v1120, %v1124
    %v1129 = vand.u32 2147483647, %v1119
    %vm1130 = vcmp.eq.f32.partialorder %v1129, 8.507059e+37
    %v1131 = vand.u32 %v1119, 2147483648
    %v1132 = vor.u32 1.1754944e-38, %v1131
    %v1133 = vsel %vm1130, %v1132, %v1128
    %v1134 = vmul.f32 1.0, %v1133
    %v1135 = vtanh.pop %v1095
    %v1136 = vxor.u32 %v1096, 2147483648
    %v1137 = vmul.f32 %v1136, 1.442695
    %v1138 = vpow.pop %v1137
    %v1139 = vadd.f32 %v1138, 1.0
    %v1140 = vrcp.pop %v1139
    %v1141 = vmul.f32 %v1139, %v1140
    %v1142 = vsub.f32 1.0, %v1141
    %v1143 = vmul.f32 %v1140, %v1142
    %v1144 = vadd.f32 %v1140, %v1143
    %vm1145 = vweird.f32 %v1139
    %vm1146 = vweird.f32 %v1140
    %vm1147 = vmor %vm1145, %vm1146
    %v1148 = vsel %vm1147, %v1140, %v1144
    %v1149 = vand.u32 2147483647, %v1139
    %vm1150 = vcmp.eq.f32.partialorder %v1149, 8.507059e+37
    %v1151 = vand.u32 %v1139, 2147483648
    %v1152 = vor.u32 1.1754944e-38, %v1151
    %v1153 = vsel %vm1150, %v1152, %v1148
    %v1154 = vmul.f32 1.0, %v1153
    %v1155 = vmul.f32 %v1134, %v1003
    %v1156 = vmul.f32 %v1115, %v1135
    %v1157 = vadd.f32 %v1155, %v1156
    %v1158 = vtanh.pop %v1157
    %v1159 = vmul.f32 %v1154, %v1158
    %s1160 = smul.u32 5, 4
    %s1161 = smul.addr %s1160, 8
    %s1162 = scalar_lea.vmem [#allocation2], %s1161
    %v1163 = vld [vmem:[%s1162] sm:$0xff]
    %v1164 = vld [vmem:[%s1162 + $0x8] sm:$0xff]
    %v1165 = vld [vmem:[%s1162 + $0x10] sm:$0xff]
    %v1166 = vld [vmem:[%s1162 + $0x18] sm:$0xff]
    %1167 = vmatpush.msra.mxu0 %v386
    %1168 = vmatpush.msra.mxu0 %v382
    %1169 = vmatpush.msra.mxu0 %v378
    %1170 = vmatpush.msra.mxu0 %v374
    %1171 = vmatpush.msra.mxu0 %v370
    %1172 = vmatpush.msra.mxu0 %v366
    %1173 = vmatpush.msra.mxu0 %v362
    %1174 = vmatpush.msra.mxu0 %v358
    %1175 = vmatpush.msra.mxu0 %v354
    %1176 = vmatpush.msra.mxu0 %v350
    %1177 = vmatpush.msra.mxu0 %v346
    %1178 = vmatpush.msra.mxu0 %v342
    %1179 = vmatpush.msra.mxu0 %v338
    %1180 = vmatpush.msra.mxu0 %v334
    %1181 = vmatpush.msra.mxu0 %v330
    %1182 = vmatpush.msra.mxu0 %v326
    %1183 = vmatmul.f32.gmra.mxu0 %v1159
    %v1184 = vpop.f32.mrf.mxu0
    %v1185 = vadd.f32 0.0, %v1184
    %1186 = vdwg.mxu0
    %1187 = vmatpush.msra.mxu0 %v387
    %1188 = vmatpush.msra.mxu0 %v383
    %1189 = vmatpush.msra.mxu0 %v379
    %1190 = vmatpush.msra.mxu0 %v375
    %1191 = vmatpush.msra.mxu0 %v371
    %1192 = vmatpush.msra.mxu0 %v367
    %1193 = vmatpush.msra.mxu0 %v363
    %1194 = vmatpush.msra.mxu0 %v359
    %1195 = vmatpush.msra.mxu0 %v355
    %1196 = vmatpush.msra.mxu0 %v351
    %1197 = vmatpush.msra.mxu0 %v347
    %1198 = vmatpush.msra.mxu0 %v343
    %1199 = vmatpush.msra.mxu0 %v339
    %1200 = vmatpush.msra.mxu0 %v335
    %1201 = vmatpush.msra.mxu0 %v331
    %1202 = vmatpush.msra.mxu0 %v327
    %1203 = vmatmul.f32.gmra.mxu0 %v1159
    %v1204 = vpop.f32.mrf.mxu0
    %v1205 = vadd.f32 0.0, %v1204
    %1206 = vdwg.mxu0
    %1207 = vmatpush.msra.mxu0 %v388
    %1208 = vmatpush.msra.mxu0 %v384
    %1209 = vmatpush.msra.mxu0 %v380
    %1210 = vmatpush.msra.mxu0 %v376
    %1211 = vmatpush.msra.mxu0 %v372
    %1212 = vmatpush.msra.mxu0 %v368
    %1213 = vmatpush.msra.mxu0 %v364
    %1214 = vmatpush.msra.mxu0 %v360
    %1215 = vmatpush.msra.mxu0 %v356
    %1216 = vmatpush.msra.mxu0 %v352
    %1217 = vmatpush.msra.mxu0 %v348
    %1218 = vmatpush.msra.mxu0 %v344
    %1219 = vmatpush.msra.mxu0 %v340
    %1220 = vmatpush.msra.mxu0 %v336
    %1221 = vmatpush.msra.mxu0 %v332
    %1222 = vmatpush.msra.mxu0 %v328
    %1223 = vmatmul.f32.gmra.mxu0 %v1159
    %v1224 = vpop.f32.mrf.mxu0
    %v1225 = vadd.f32 0.0, %v1224
    %1226 = vdwg.mxu0
    %1227 = vmatpush.msra.mxu0 %v389
    %1228 = vmatpush.msra.mxu0 %v385
    %1229 = vmatpush.msra.mxu0 %v381
    %1230 = vmatpush.msra.mxu0 %v377
    %1231 = vmatpush.msra.mxu0 %v373
    %1232 = vmatpush.msra.mxu0 %v369
    %1233 = vmatpush.msra.mxu0 %v365
    %1234 = vmatpush.msra.mxu0 %v361
    %1235 = vmatpush.msra.mxu0 %v357
    %1236 = vmatpush.msra.mxu0 %v353
    %1237 = vmatpush.msra.mxu0 %v349
    %1238 = vmatpush.msra.mxu0 %v345
    %1239 = vmatpush.msra.mxu0 %v341
    %1240 = vmatpush.msra.mxu0 %v337
    %1241 = vmatpush.msra.mxu0 %v333
    %1242 = vmatpush.msra.mxu0 %v329
    %1243 = vmatmul.f32.gmra.mxu0 %v1159
    %v1244 = vpop.f32.mrf.mxu0
    %v1245 = vadd.f32 0.0, %v1244
    %1246 = vdwg.mxu0
    %v1247 = vadd.f32 %v1163, %v1185
    %v1248 = vadd.f32 %v1164, %v1205
    %v1249 = vadd.f32 %v1165, %v1225
    %v1250 = vadd.f32 %v1166, %v1245
    %v1251 = vxor.u32 %v1247, 2147483648
    %v1252 = vmul.f32 %v1251, 1.442695
    %v1253 = vpow.pop %v1252
    %v1254 = vadd.f32 %v1253, 1.0
    %v1255 = vrcp.pop %v1254
    %v1256 = vmul.f32 %v1254, %v1255
    %v1257 = vsub.f32 1.0, %v1256
    %v1258 = vmul.f32 %v1255, %v1257
    %v1259 = vadd.f32 %v1255, %v1258
    %vm1260 = vweird.f32 %v1254
    %vm1261 = vweird.f32 %v1255
    %vm1262 = vmor %vm1260, %vm1261
    %v1263 = vsel %vm1262, %v1255, %v1259
    %v1264 = vand.u32 2147483647, %v1254
    %vm1265 = vcmp.eq.f32.partialorder %v1264, 8.507059e+37
    %v1266 = vand.u32 %v1254, 2147483648
    %v1267 = vor.u32 1.1754944e-38, %v1266
    %v1268 = vsel %vm1265, %v1267, %v1263
    %v1269 = vmul.f32 1.0, %v1268
    %v1270 = vxor.u32 %v1248, 2147483648
    %v1271 = vmul.f32 %v1270, 1.442695
    %v1272 = vpow.pop %v1271
    %v1273 = vadd.f32 %v1272, 1.0
    %v1274 = vrcp.pop %v1273
    %v1275 = vmul.f32 %v1273, %v1274
    %v1276 = vsub.f32 1.0, %v1275
    %v1277 = vmul.f32 %v1274, %v1276
    %v1278 = vadd.f32 %v1274, %v1277
    %vm1279 = vweird.f32 %v1273
    %vm1280 = vweird.f32 %v1274
    %vm1281 = vmor %vm1279, %vm1280
    %v1282 = vsel %vm1281, %v1274, %v1278
    %v1283 = vand.u32 2147483647, %v1273
    %vm1284 = vcmp.eq.f32.partialorder %v1283, 8.507059e+37
    %v1285 = vand.u32 %v1273, 2147483648
    %v1286 = vor.u32 1.1754944e-38, %v1285
    %v1287 = vsel %vm1284, %v1286, %v1282
    %v1288 = vmul.f32 1.0, %v1287
    %v1289 = vtanh.pop %v1249
    %v1290 = vxor.u32 %v1250, 2147483648
    %v1291 = vmul.f32 %v1290, 1.442695
    %v1292 = vpow.pop %v1291
    %v1293 = vadd.f32 %v1292, 1.0
    %v1294 = vrcp.pop %v1293
    %v1295 = vmul.f32 %v1293, %v1294
    %v1296 = vsub.f32 1.0, %v1295
    %v1297 = vmul.f32 %v1294, %v1296
    %v1298 = vadd.f32 %v1294, %v1297
    %vm1299 = vweird.f32 %v1293
    %vm1300 = vweird.f32 %v1294
    %vm1301 = vmor %vm1299, %vm1300
    %v1302 = vsel %vm1301, %v1294, %v1298
    %v1303 = vand.u32 2147483647, %v1293
    %vm1304 = vcmp.eq.f32.partialorder %v1303, 8.507059e+37
    %v1305 = vand.u32 %v1293, 2147483648
    %v1306 = vor.u32 1.1754944e-38, %v1305
    %v1307 = vsel %vm1304, %v1306, %v1302
    %v1308 = vmul.f32 1.0, %v1307
    %v1309 = vmul.f32 %v1288, %v1157
    %v1310 = vmul.f32 %v1269, %v1289
    %v1311 = vadd.f32 %v1309, %v1310
    %v1312 = vtanh.pop %v1311
    %v1313 = vmul.f32 %v1308, %v1312
    %s1314 = smul.u32 6, 4
    %s1315 = smul.addr %s1314, 8
    %s1316 = scalar_lea.vmem [#allocation2], %s1315
    %v1317 = vld [vmem:[%s1316] sm:$0xff]
    %v1318 = vld [vmem:[%s1316 + $0x8] sm:$0xff]
    %v1319 = vld [vmem:[%s1316 + $0x10] sm:$0xff]
    %v1320 = vld [vmem:[%s1316 + $0x18] sm:$0xff]
    %1321 = vmatpush.msra.mxu0 %v386
    %1322 = vmatpush.msra.mxu0 %v382
    %1323 = vmatpush.msra.mxu0 %v378
    %1324 = vmatpush.msra.mxu0 %v374
    %1325 = vmatpush.msra.mxu0 %v370
    %1326 = vmatpush.msra.mxu0 %v366
    %1327 = vmatpush.msra.mxu0 %v362
    %1328 = vmatpush.msra.mxu0 %v358
    %1329 = vmatpush.msra.mxu0 %v354
    %1330 = vmatpush.msra.mxu0 %v350
    %1331 = vmatpush.msra.mxu0 %v346
    %1332 = vmatpush.msra.mxu0 %v342
    %1333 = vmatpush.msra.mxu0 %v338
    %1334 = vmatpush.msra.mxu0 %v334
    %1335 = vmatpush.msra.mxu0 %v330
    %1336 = vmatpush.msra.mxu0 %v326
    %1337 = vmatmul.f32.gmra.mxu0 %v1313
    %v1338 = vpop.f32.mrf.mxu0
    %v1339 = vadd.f32 0.0, %v1338
    %1340 = vdwg.mxu0
    %1341 = vmatpush.msra.mxu0 %v387
    %1342 = vmatpush.msra.mxu0 %v383
    %1343 = vmatpush.msra.mxu0 %v379
    %1344 = vmatpush.msra.mxu0 %v375
    %1345 = vmatpush.msra.mxu0 %v371
    %1346 = vmatpush.msra.mxu0 %v367
    %1347 = vmatpush.msra.mxu0 %v363
    %1348 = vmatpush.msra.mxu0 %v359
    %1349 = vmatpush.msra.mxu0 %v355
    %1350 = vmatpush.msra.mxu0 %v351
    %1351 = vmatpush.msra.mxu0 %v347
    %1352 = vmatpush.msra.mxu0 %v343
    %1353 = vmatpush.msra.mxu0 %v339
    %1354 = vmatpush.msra.mxu0 %v335
    %1355 = vmatpush.msra.mxu0 %v331
    %1356 = vmatpush.msra.mxu0 %v327
    %1357 = vmatmul.f32.gmra.mxu0 %v1313
    %v1358 = vpop.f32.mrf.mxu0
    %v1359 = vadd.f32 0.0, %v1358
    %1360 = vdwg.mxu0
    %1361 = vmatpush.msra.mxu0 %v388
    %1362 = vmatpush.msra.mxu0 %v384
    %1363 = vmatpush.msra.mxu0 %v380
    %1364 = vmatpush.msra.mxu0 %v376
    %1365 = vmatpush.msra.mxu0 %v372
    %1366 = vmatpush.msra.mxu0 %v368
    %1367 = vmatpush.msra.mxu0 %v364
    %1368 = vmatpush.msra.mxu0 %v360
    %1369 = vmatpush.msra.mxu0 %v356
    %1370 = vmatpush.msra.mxu0 %v352
    %1371 = vmatpush.msra.mxu0 %v348
    %1372 = vmatpush.msra.mxu0 %v344
    %1373 = vmatpush.msra.mxu0 %v340
    %1374 = vmatpush.msra.mxu0 %v336
    %1375 = vmatpush.msra.mxu0 %v332
    %1376 = vmatpush.msra.mxu0 %v328
    %1377 = vmatmul.f32.gmra.mxu0 %v1313
    %v1378 = vpop.f32.mrf.mxu0
    %v1379 = vadd.f32 0.0, %v1378
    %1380 = vdwg.mxu0
    %1381 = vmatpush.msra.mxu0 %v389
    %1382 = vmatpush.msra.mxu0 %v385
    %1383 = vmatpush.msra.mxu0 %v381
    %1384 = vmatpush.msra.mxu0 %v377
    %1385 = vmatpush.msra.mxu0 %v373
    %1386 = vmatpush.msra.mxu0 %v369
    %1387 = vmatpush.msra.mxu0 %v365
    %1388 = vmatpush.msra.mxu0 %v361
    %1389 = vmatpush.msra.mxu0 %v357
    %1390 = vmatpush.msra.mxu0 %v353
    %1391 = vmatpush.msra.mxu0 %v349
    %1392 = vmatpush.msra.mxu0 %v345
    %1393 = vmatpush.msra.mxu0 %v341
    %1394 = vmatpush.msra.mxu0 %v337
    %1395 = vmatpush.msra.mxu0 %v333
    %1396 = vmatpush.msra.mxu0 %v329
    %1397 = vmatmul.f32.gmra.mxu0 %v1313
    %v1398 = vpop.f32.mrf.mxu0
    %v1399 = vadd.f32 0.0, %v1398
    %1400 = vdwg.mxu0
    %v1401 = vadd.f32 %v1317, %v1339
    %v1402 = vadd.f32 %v1318, %v1359
    %v1403 = vadd.f32 %v1319, %v1379
    %v1404 = vadd.f32 %v1320, %v1399
    %v1405 = vxor.u32 %v1401, 2147483648
    %v1406 = vmul.f32 %v1405, 1.442695
    %v1407 = vpow.pop %v1406
    %v1408 = vadd.f32 %v1407, 1.0
    %v1409 = vrcp.pop %v1408
    %v1410 = vmul.f32 %v1408, %v1409
    %v1411 = vsub.f32 1.0, %v1410
    %v1412 = vmul.f32 %v1409, %v1411
    %v1413 = vadd.f32 %v1409, %v1412
    %vm1414 = vweird.f32 %v1408
    %vm1415 = vweird.f32 %v1409
    %vm1416 = vmor %vm1414, %vm1415
    %v1417 = vsel %vm1416, %v1409, %v1413
    %v1418 = vand.u32 2147483647, %v1408
    %vm1419 = vcmp.eq.f32.partialorder %v1418, 8.507059e+37
    %v1420 = vand.u32 %v1408, 2147483648
    %v1421 = vor.u32 1.1754944e-38, %v1420
    %v1422 = vsel %vm1419, %v1421, %v1417
    %v1423 = vmul.f32 1.0, %v1422
    %v1424 = vxor.u32 %v1402, 2147483648
    %v1425 = vmul.f32 %v1424, 1.442695
    %v1426 = vpow.pop %v1425
    %v1427 = vadd.f32 %v1426, 1.0
    %v1428 = vrcp.pop %v1427
    %v1429 = vmul.f32 %v1427, %v1428
    %v1430 = vsub.f32 1.0, %v1429
    %v1431 = vmul.f32 %v1428, %v1430
    %v1432 = vadd.f32 %v1428, %v1431
    %vm1433 = vweird.f32 %v1427
    %vm1434 = vweird.f32 %v1428
    %vm1435 = vmor %vm1433, %vm1434
    %v1436 = vsel %vm1435, %v1428, %v1432
    %v1437 = vand.u32 2147483647, %v1427
    %vm1438 = vcmp.eq.f32.partialorder %v1437, 8.507059e+37
    %v1439 = vand.u32 %v1427, 2147483648
    %v1440 = vor.u32 1.1754944e-38, %v1439
    %v1441 = vsel %vm1438, %v1440, %v1436
    %v1442 = vmul.f32 1.0, %v1441
    %v1443 = vtanh.pop %v1403
    %v1444 = vxor.u32 %v1404, 2147483648
    %v1445 = vmul.f32 %v1444, 1.442695
    %v1446 = vpow.pop %v1445
    %v1447 = vadd.f32 %v1446, 1.0
    %v1448 = vrcp.pop %v1447
    %v1449 = vmul.f32 %v1447, %v1448
    %v1450 = vsub.f32 1.0, %v1449
    %v1451 = vmul.f32 %v1448, %v1450
    %v1452 = vadd.f32 %v1448, %v1451
    %vm1453 = vweird.f32 %v1447
    %vm1454 = vweird.f32 %v1448
    %vm1455 = vmor %vm1453, %vm1454
    %v1456 = vsel %vm1455, %v1448, %v1452
    %v1457 = vand.u32 2147483647, %v1447
    %vm1458 = vcmp.eq.f32.partialorder %v1457, 8.507059e+37
    %v1459 = vand.u32 %v1447, 2147483648
    %v1460 = vor.u32 1.1754944e-38, %v1459
    %v1461 = vsel %vm1458, %v1460, %v1456
    %v1462 = vmul.f32 1.0, %v1461
    %v1463 = vmul.f32 %v1442, %v1311
    %v1464 = vmul.f32 %v1423, %v1443
    %v1465 = vadd.f32 %v1463, %v1464
    %v1466 = vtanh.pop %v1465
    %v1467 = vmul.f32 %v1462, %v1466
    %s1468 = smul.u32 7, 4
    %s1469 = smul.addr %s1468, 8
    %s1470 = scalar_lea.vmem [#allocation2], %s1469
    %v1471 = vld [vmem:[%s1470] sm:$0xff]
    %v1472 = vld [vmem:[%s1470 + $0x8] sm:$0xff]
    %v1473 = vld [vmem:[%s1470 + $0x10] sm:$0xff]
    %v1474 = vld [vmem:[%s1470 + $0x18] sm:$0xff]
    %1475 = vmatpush.msra.mxu0 %v386
    %1476 = vmatpush.msra.mxu0 %v382
    %1477 = vmatpush.msra.mxu0 %v378
    %1478 = vmatpush.msra.mxu0 %v374
    %1479 = vmatpush.msra.mxu0 %v370
    %1480 = vmatpush.msra.mxu0 %v366
    %1481 = vmatpush.msra.mxu0 %v362
    %1482 = vmatpush.msra.mxu0 %v358
    %1483 = vmatpush.msra.mxu0 %v354
    %1484 = vmatpush.msra.mxu0 %v350
    %1485 = vmatpush.msra.mxu0 %v346
    %1486 = vmatpush.msra.mxu0 %v342
    %1487 = vmatpush.msra.mxu0 %v338
    %1488 = vmatpush.msra.mxu0 %v334
    %1489 = vmatpush.msra.mxu0 %v330
    %1490 = vmatpush.msra.mxu0 %v326
    %1491 = vmatmul.f32.gmra.mxu0 %v1467
    %v1492 = vpop.f32.mrf.mxu0
    %v1493 = vadd.f32 0.0, %v1492
    %1494 = vdwg.mxu0
    %1495 = vmatpush.msra.mxu0 %v387
    %1496 = vmatpush.msra.mxu0 %v383
    %1497 = vmatpush.msra.mxu0 %v379
    %1498 = vmatpush.msra.mxu0 %v375
    %1499 = vmatpush.msra.mxu0 %v371
    %1500 = vmatpush.msra.mxu0 %v367
    %1501 = vmatpush.msra.mxu0 %v363
    %1502 = vmatpush.msra.mxu0 %v359
    %1503 = vmatpush.msra.mxu0 %v355
    %1504 = vmatpush.msra.mxu0 %v351
    %1505 = vmatpush.msra.mxu0 %v347
    %1506 = vmatpush.msra.mxu0 %v343
    %1507 = vmatpush.msra.mxu0 %v339
    %1508 = vmatpush.msra.mxu0 %v335
    %1509 = vmatpush.msra.mxu0 %v331
    %1510 = vmatpush.msra.mxu0 %v327
    %1511 = vmatmul.f32.gmra.mxu0 %v1467
    %v1512 = vpop.f32.mrf.mxu0
    %v1513 = vadd.f32 0.0, %v1512
    %1514 = vdwg.mxu0
    %1515 = vmatpush.msra.mxu0 %v388
    %1516 = vmatpush.msra.mxu0 %v384
    %1517 = vmatpush.msra.mxu0 %v380
    %1518 = vmatpush.msra.mxu0 %v376
    %1519 = vmatpush.msra.mxu0 %v372
    %1520 = vmatpush.msra.mxu0 %v368
    %1521 = vmatpush.msra.mxu0 %v364
    %1522 = vmatpush.msra.mxu0 %v360
    %1523 = vmatpush.msra.mxu0 %v356
    %1524 = vmatpush.msra.mxu0 %v352
    %1525 = vmatpush.msra.mxu0 %v348
    %1526 = vmatpush.msra.mxu0 %v344
    %1527 = vmatpush.msra.mxu0 %v340
    %1528 = vmatpush.msra.mxu0 %v336
    %1529 = vmatpush.msra.mxu0 %v332
    %1530 = vmatpush.msra.mxu0 %v328
    %1531 = vmatmul.f32.gmra.mxu0 %v1467
    %v1532 = vpop.f32.mrf.mxu0
    %v1533 = vadd.f32 0.0, %v1532
    %1534 = vdwg.mxu0
    %1535 = vmatpush.msra.mxu0 %v389
    %1536 = vmatpush.msra.mxu0 %v385
    %1537 = vmatpush.msra.mxu0 %v381
    %1538 = vmatpush.msra.mxu0 %v377
    %1539 = vmatpush.msra.mxu0 %v373
    %1540 = vmatpush.msra.mxu0 %v369
    %1541 = vmatpush.msra.mxu0 %v365
    %1542 = vmatpush.msra.mxu0 %v361
    %1543 = vmatpush.msra.mxu0 %v357
    %1544 = vmatpush.msra.mxu0 %v353
    %1545 = vmatpush.msra.mxu0 %v349
    %1546 = vmatpush.msra.mxu0 %v345
    %1547 = vmatpush.msra.mxu0 %v341
    %1548 = vmatpush.msra.mxu0 %v337
    %1549 = vmatpush.msra.mxu0 %v333
    %1550 = vmatpush.msra.mxu0 %v329
    %1551 = vmatmul.f32.gmra.mxu0 %v1467
    %v1552 = vpop.f32.mrf.mxu0
    %v1553 = vadd.f32 0.0, %v1552
    %1554 = vdwg.mxu0
    %v1555 = vadd.f32 %v1471, %v1493
    %v1556 = vadd.f32 %v1472, %v1513
    %v1557 = vadd.f32 %v1473, %v1533
    %v1558 = vadd.f32 %v1474, %v1553
    %v1559 = vxor.u32 %v1555, 2147483648
    %v1560 = vmul.f32 %v1559, 1.442695
    %v1561 = vpow.pop %v1560
    %v1562 = vadd.f32 %v1561, 1.0
    %v1563 = vrcp.pop %v1562
    %v1564 = vmul.f32 %v1562, %v1563
    %v1565 = vsub.f32 1.0, %v1564
    %v1566 = vmul.f32 %v1563, %v1565
    %v1567 = vadd.f32 %v1563, %v1566
    %vm1568 = vweird.f32 %v1562
    %vm1569 = vweird.f32 %v1563
    %vm1570 = vmor %vm1568, %vm1569
    %v1571 = vsel %vm1570, %v1563, %v1567
    %v1572 = vand.u32 2147483647, %v1562
    %vm1573 = vcmp.eq.f32.partialorder %v1572, 8.507059e+37
    %v1574 = vand.u32 %v1562, 2147483648
    %v1575 = vor.u32 1.1754944e-38, %v1574
    %v1576 = vsel %vm1573, %v1575, %v1571
    %v1577 = vmul.f32 1.0, %v1576
    %v1578 = vxor.u32 %v1556, 2147483648
    %v1579 = vmul.f32 %v1578, 1.442695
    %v1580 = vpow.pop %v1579
    %v1581 = vadd.f32 %v1580, 1.0
    %v1582 = vrcp.pop %v1581
    %v1583 = vmul.f32 %v1581, %v1582
    %v1584 = vsub.f32 1.0, %v1583
    %v1585 = vmul.f32 %v1582, %v1584
    %v1586 = vadd.f32 %v1582, %v1585
    %vm1587 = vweird.f32 %v1581
    %vm1588 = vweird.f32 %v1582
    %vm1589 = vmor %vm1587, %vm1588
    %v1590 = vsel %vm1589, %v1582, %v1586
    %v1591 = vand.u32 2147483647, %v1581
    %vm1592 = vcmp.eq.f32.partialorder %v1591, 8.507059e+37
    %v1593 = vand.u32 %v1581, 2147483648
    %v1594 = vor.u32 1.1754944e-38, %v1593
    %v1595 = vsel %vm1592, %v1594, %v1590
    %v1596 = vmul.f32 1.0, %v1595
    %v1597 = vtanh.pop %v1557
    %v1598 = vxor.u32 %v1558, 2147483648
    %v1599 = vmul.f32 %v1598, 1.442695
    %v1600 = vpow.pop %v1599
    %v1601 = vadd.f32 %v1600, 1.0
    %v1602 = vrcp.pop %v1601
    %v1603 = vmul.f32 %v1601, %v1602
    %v1604 = vsub.f32 1.0, %v1603
    %v1605 = vmul.f32 %v1602, %v1604
    %v1606 = vadd.f32 %v1602, %v1605
    %vm1607 = vweird.f32 %v1601
    %vm1608 = vweird.f32 %v1602
    %vm1609 = vmor %vm1607, %vm1608
    %v1610 = vsel %vm1609, %v1602, %v1606
    %v1611 = vand.u32 2147483647, %v1601
    %vm1612 = vcmp.eq.f32.partialorder %v1611, 8.507059e+37
    %v1613 = vand.u32 %v1601, 2147483648
    %v1614 = vor.u32 1.1754944e-38, %v1613
    %v1615 = vsel %vm1612, %v1614, %v1610
    %v1616 = vmul.f32 1.0, %v1615
    %v1617 = vmul.f32 %v1596, %v1465
    %v1618 = vmul.f32 %v1577, %v1597
    %v1619 = vadd.f32 %v1617, %v1618
    %v1620 = vtanh.pop %v1619
    %v1621 = vmul.f32 %v1616, %v1620
    %v1622 = vld [vmem:[#allocation8] sm:$0xff]
    %v1623 = vld [vmem:[#allocation8 + $0x8] sm:$0xff]
    %v1624 = vld [vmem:[#allocation8 + $0x10] sm:$0xff]
    %v1625 = vld [vmem:[#allocation8 + $0x18] sm:$0xff]
    %v1626 = vld [vmem:[#allocation8 + $0x20] sm:$0xff]
    %v1627 = vld [vmem:[#allocation8 + $0x28] sm:$0xff]
    %v1628 = vld [vmem:[#allocation8 + $0x30] sm:$0xff]
    %v1629 = vld [vmem:[#allocation8 + $0x38] sm:$0xff]
    %v1630 = vld [vmem:[#allocation8 + $0x40] sm:$0xff]
    %v1631 = vld [vmem:[#allocation8 + $0x48] sm:$0xff]
    %v1632 = vld [vmem:[#allocation8 + $0x50] sm:$0xff]
    %v1633 = vld [vmem:[#allocation8 + $0x58] sm:$0xff]
    %v1634 = vld [vmem:[#allocation8 + $0x60] sm:$0xff]
    %v1635 = vld [vmem:[#allocation8 + $0x68] sm:$0xff]
    %v1636 = vld [vmem:[#allocation8 + $0x70] sm:$0xff]
    %v1637 = vld [vmem:[#allocation8 + $0x78] sm:$0xff]
    %v1638 = vld [vmem:[%s5] sm:$0x1]
    %v1640 = vperm.slane %v1638, 0
    %1642 = vmatpush.msra.mxu0 %v1637
    %1643 = vmatpush.msra.mxu0 %v1636
    %1644 = vmatpush.msra.mxu0 %v1635
    %1645 = vmatpush.msra.mxu0 %v1634
    %1646 = vmatpush.msra.mxu0 %v1633
    %1647 = vmatpush.msra.mxu0 %v1632
    %1648 = vmatpush.msra.mxu0 %v1631
    %1649 = vmatpush.msra.mxu0 %v1630
    %1650 = vmatpush.msra.mxu0 %v1629
    %1651 = vmatpush.msra.mxu0 %v1628
    %1652 = vmatpush.msra.mxu0 %v1627
    %1653 = vmatpush.msra.mxu0 %v1626
    %1654 = vmatpush.msra.mxu0 %v1625
    %1655 = vmatpush.msra.mxu0 %v1624
    %1656 = vmatpush.msra.mxu0 %v1623
    %1657 = vmatpush.msra.mxu0 %v1622
    %1658 = vmatmul.f32.gmra.mxu0 %v1621
    %v1659 = vpop.f32.mrf.mxu0
    %v1660 = vadd.f32 %v1640, %v1659
    %1661 = vdwg.mxu0
    %1662 = vst [vmem:[#allocation9] sm:$0xff] %v1660
    // Predicated region
    $region38: #{tpu_custom_call.1} parent=1 // pred_check
      _
    $region39: #{tpu_custom_call.1} parent=1 // pred_check_branch
      %1664 = sbr.rel (0) target = $region41
    $region40: #{tpu_custom_call.1} parent=1 // pred_region
      %1666 = vsyncadd [#allocation5], 0
      %s1668 = sshll.u32 [#allocation9], 4
      %s1669 = int_to_ptr.vmem [resolvable:$true] %s1668
      %s1670 = sshll.u32 %s6, 4
      %s1671 = int_to_ptr.hbm [resolvable:$true] %s1670
      %1673 = dma.vmem_to_hbm [thread:$0]  %s1669, 128, %s1671, [#allocation5]
    $region41: #{tpu_custom_call.1} parent=1 // pred_fallthru
      _
    // Predicated region
    $region42: #{tpu_custom_call.1} parent=1 // pred_check
      _
    $region43: #{tpu_custom_call.1} parent=1 // pred_check_branch
      %1675 = sbr.rel (0) target = $region45
    $region44: #{tpu_custom_call.1} parent=1 // pred_region
      %1677 = dma.done [#allocation5], 128
    $region45: #{tpu_custom_call.1} parent=1 // pred_fallthru
      _
    %1678 = vsyncpa [#allocation4], 1
    %1679 = vsyncpa [#allocation7], 1
    %1680 = vsyncpa [#allocation5], 1

</llo_original>
